<compile_context>
chip_gen: v6e
topology: v6e:2x2x1
jax: 0.10.0
libtpu: 0.0.40
codegen_flags: <defaults>
</compile_context>

<pallas_src>
import functools

import jax
import jax.numpy as jnp
from jax.experimental import pallas as pl
from jax.experimental.pallas import tpu as pltpu

_EPS = 1e-5     # PyTorch InstanceNorm2d default eps (affine=False, biased var)
_SLOPE = 0.2    # LeakyReLU negative slope


# --------------------------------------------------------------------------
# Fused Pallas kernel: conv-as-matmul + bias [+ InstanceNorm] [+ LeakyReLU]
# --------------------------------------------------------------------------

def _fused_conv_kernel(w_ref, p_ref, b_ref, o_ref, *, use_in, slope):
    # w_ref: (Cp, Kp) bf16 | p_ref: (1, Kp, M) bf16 | b_ref: (Cp, 1) f32
    acc = jnp.dot(w_ref[...], p_ref[0],
                  preferred_element_type=jnp.float32)           # (Cp, M) f32
    acc = acc + b_ref[...]                                      # + bias
    if use_in:
        # InstanceNorm2d: per-(sample, channel) stats over the spatial (lane) axis.
        mean = jnp.mean(acc, axis=1, keepdims=True)
        var = jnp.mean(jnp.square(acc - mean), axis=1, keepdims=True)
        acc = (acc - mean) * jax.lax.rsqrt(var + _EPS)
    if slope is not None:
        acc = jnp.maximum(acc, slope * acc)                     # LeakyReLU
    o_ref[0] = acc


# --------------------------------------------------------------------------
# Conv layer wrapper (im2col glue in NCHW + one fused pallas_call)
# --------------------------------------------------------------------------

def _im2col_nchw(x, kh, kw, stride, pad):
    """x: (N,C,H,W) -> patches (N, kh*kw*C, OH*OW); K order = (kh, kw, c)."""
    xp = jnp.pad(x, ((0, 0), (0, 0), (pad, pad), (pad, pad)))
    n, c, hp, wp = xp.shape
    oh = (hp - kh) // stride + 1
    ow = (wp - kw) // stride + 1
    taps = []
    for i in range(kh):
        for j in range(kw):
            s = xp[:, :, i:i + stride * oh:stride, j:j + stride * ow:stride]
            taps.append(s.reshape(n, c, oh * ow))
    return jnp.concatenate(taps, axis=1), oh, ow


def conv_block(x, w, b, *, stride, pad, use_in, slope):
    """Fused Conv2d + bias [+ InstanceNorm2d] [+ LeakyReLU].  NCHW in / out.

    w: PyTorch Conv2d layout (Cout, Cin, KH, KW); b: (Cout,).
    """
    cout, cin, kh, kw = w.shape
    n = x.shape[0]

    # bf16 patches: native MXU dtype + half the gather HBM traffic.
    patches, oh, ow = _im2col_nchw(x.astype(jnp.bfloat16), kh, kw, stride, pad)
    k = kh * kw * cin
    m = oh * ow
    kp = ((k + 127) // 128) * 128          # lane-align contraction dim
    cp = ((cout + 7) // 8) * 8             # sublane-align channel dim

    patches = jnp.pad(patches, ((0, 0), (0, kp - k), (0, 0)))
    w_mat = jnp.transpose(w, (0, 2, 3, 1)).reshape(cout, k)       # (kh,kw,cin) order
    w_mat = jnp.pad(w_mat, ((0, cp - cout), (0, kp - k))).astype(jnp.bfloat16)
    bias = jnp.pad(b, (0, cp - cout)).astype(jnp.float32).reshape(cp, 1)

    out = pl.pallas_call(
        functools.partial(_fused_conv_kernel, use_in=use_in, slope=slope),
        out_shape=jax.ShapeDtypeStruct((n, cp, m), jnp.float32),
        grid=(n,),
        in_specs=[
            pl.BlockSpec((cp, kp), lambda i: (0, 0)),        # weights (resident)
            pl.BlockSpec((1, kp, m), lambda i: (i, 0, 0)),   # per-sample patches
            pl.BlockSpec((cp, 1), lambda i: (0, 0)),         # bias (resident)
        ],
        out_specs=pl.BlockSpec((1, cp, m), lambda i: (i, 0, 0)),
        compiler_params=pltpu.CompilerParams(
            dimension_semantics=("parallel",)),
    )(w_mat, patches, bias)

    if cp != cout:                          # only the final 1-channel conv
        out = out[:, :cout, :]
    return out.reshape(n, cout, oh, ow)


# --------------------------------------------------------------------------
# Discriminator (PatchGAN): params + forward
# --------------------------------------------------------------------------

def init_discriminator_params(key, input_nc=3, ndf=8):
    keys = iter(jax.random.split(key, 16))

    def w_init(shape):
        return 0.05 * jax.random.normal(next(keys), shape, jnp.float32)

    def b_init(c):
        return 0.01 * jax.random.normal(next(keys), (c,), jnp.float32)

    params = {
        'w1': w_init((ndf, input_nc, 4, 4)),        'b1': b_init(ndf),
        'w2': w_init((ndf * 2, ndf, 4, 4)),         'b2': b_init(ndf * 2),
        'w3': w_init((ndf * 4, ndf * 2, 4, 4)),     'b3': b_init(ndf * 4),
        'w4': w_init((1, ndf * 4, 4, 4)),           'b4': b_init(1),
    }
    return params


def discriminator_forward(x_nchw, params):
    x = x_nchw.astype(jnp.float32)
    # Conv(4,2,1) + LeakyReLU(0.2)
    x = conv_block(x, params['w1'], params['b1'], stride=2, pad=1,
                   use_in=False, slope=_SLOPE)
    # Conv(4,2,1) + InstanceNorm + LeakyReLU(0.2)
    x = conv_block(x, params['w2'], params['b2'], stride=2, pad=1,
                   use_in=True, slope=_SLOPE)
    # Conv(4,2,1) + InstanceNorm + LeakyReLU(0.2)
    x = conv_block(x, params['w3'], params['b3'], stride=2, pad=1,
                   use_in=True, slope=_SLOPE)
    # Conv(4,1,1) -> patch logits
    x = conv_block(x, params['w4'], params['b4'], stride=1, pad=1,
                   use_in=False, slope=None)
    return x


# --------------------------------------------------------------------------
# Pure-JAX reference (for a loose numerical sanity check; bf16 MXU operands
# in the Pallas path introduce ~1e-2-level differences)
# --------------------------------------------------------------------------

def _ref_forward(x, params):
    def conv(x, w, b, stride, pad):
        y = jax.lax.conv_general_dilated(
            x, w, window_strides=(stride, stride),
            padding=[(pad, pad), (pad, pad)],
            dimension_numbers=('NCHW', 'OIHW', 'NCHW'))
        return y + b.reshape(1, -1, 1, 1)

    def inorm(v):
        m = jnp.mean(v, axis=(2, 3), keepdims=True)
        var = jnp.mean(jnp.square(v - m), axis=(2, 3), keepdims=True)
        return (v - m) * jax.lax.rsqrt(var + _EPS)

    def lrelu(v):
        return jnp.maximum(v, _SLOPE * v)

    x = lrelu(conv(x, params['w1'], params['b1'], 2, 1))
    x = lrelu(inorm(conv(x, params['w2'], params['b2'], 2, 1)))
    x = lrelu(inorm(conv(x, params['w3'], params['b3'], 2, 1)))
    return conv(x, params['w4'], params['b4'], 1, 1)


# --------------------------------------------------------------------------

if __name__ == "__main__":
    key = jax.random.PRNGKey(0)
    k_params, k_x = jax.random.split(key)

    params = init_discriminator_params(k_params, input_nc=3, ndf=8)
    # PyTorch-style NCHW input
    x = jax.random.normal(k_x, (2, 3, 16, 16), jnp.float32)

    fwd = jax.jit(discriminator_forward)
    y = jax.block_until_ready(fwd(x, params))

    # 16x16 -> 8x8 -> 4x4 -> 2x2 -> 1x1 PatchGAN map with 1 channel
    assert y.shape == (2, 1, 1, 1), y.shape
    assert bool(jnp.all(jnp.isfinite(y)))

    y_ref = jax.block_until_ready(jax.jit(_ref_forward)(x, params))
    max_err = float(jnp.max(jnp.abs(y - y_ref)))
    assert max_err < 0.25, f"max abs diff vs reference = {max_err}"

    print("KERNEL_OK")
</pallas_src>

<mosaic_0001>
module attributes {stable_mosaic.version = 11 : i64} {
  func.func @_fused_conv_kernel(%arg0: i32, %arg1: memref<8x128xbf16, #tpu.memory_space<vmem>>, %arg2: memref<1x128x64xbf16, #tpu.memory_space<vmem>>, %arg3: memref<8x1xf32, #tpu.memory_space<vmem>>, %arg4: memref<1x8x64xf32, #tpu.memory_space<vmem>>) attributes {dimension_semantics = [#tpu.dimension_semantics<parallel>], iteration_bounds = array<i64: 2>, scalar_prefetch = 0 : i64, scratch_operands = 0 : i64, tpu.core_type = #tpu.core_type<tc>, window_params = [{pipeline_mode = #tpu.pipeline_mode<synchronous>, transform_indices = @transform_0, window_bounds = array<i64: 8, 128>}, {transform_indices = @transform_1, window_bounds = array<i64: 1, 128, 64>}, {pipeline_mode = #tpu.pipeline_mode<synchronous>, transform_indices = @transform_2, window_bounds = array<i64: 8, 1>}, {transform_indices = @transform_3, window_bounds = array<i64: 1, 8, 64>}]} {
    %c0 = arith.constant 0 : index
    %c0_0 = arith.constant 0 : index
    %0 = vector.load %arg1[%c0, %c0_0] : memref<8x128xbf16, #tpu.memory_space<vmem>>, vector<8x128xbf16>
    %c0_1 = arith.constant 0 : index
    %c0_2 = arith.constant 0 : index
    %c0_3 = arith.constant 0 : index
    %1 = vector.load %arg2[%c0_1, %c0_2, %c0_3] : memref<1x128x64xbf16, #tpu.memory_space<vmem>>, vector<1x128x64xbf16>
    %2 = vector.shape_cast %1 : vector<1x128x64xbf16> to vector<128x64xbf16>
    %cst = arith.constant dense<0.000000e+00> : vector<8x64xf32>
    %3 = tpu.matmul %0, %2, %cst {dimension_numbers = #tpu.dot_dimension_numbers<[1], [0], [0], [1], [0, 0, 1, 1], [], []>} : vector<8x128xbf16>, vector<128x64xbf16>, vector<8x64xf32> -> vector<8x64xf32>
    %c0_4 = arith.constant 0 : index
    %c0_5 = arith.constant 0 : index
    %4 = vector.load %arg3[%c0_4, %c0_5] : memref<8x1xf32, #tpu.memory_space<vmem>>, vector<8x1xf32>
    %5 = vector.broadcast %4 : vector<8x1xf32> to vector<8x64xf32>
    %6 = arith.addf %3, %5 : vector<8x64xf32>
    %cst_6 = arith.constant 2.000000e-01 : f32
    %7 = vector.broadcast %cst_6 : f32 to vector<8x64xf32>
    %8 = arith.mulf %7, %6 : vector<8x64xf32>
    %9 = arith.maximumf %6, %8 : vector<8x64xf32>
    %c0_7 = arith.constant 0 : index
    %c0_8 = arith.constant 0 : index
    %c0_9 = arith.constant 0 : index
    %10 = vector.load %arg4[%c0_7, %c0_8, %c0_9] : memref<1x8x64xf32, #tpu.memory_space<vmem>>, vector<1x8x64xf32>
    %11 = vector.shape_cast %10 : vector<1x8x64xf32> to vector<8x64xf32>
    %12 = vector.shape_cast %9 : vector<8x64xf32> to vector<1x8x64xf32>
    tpu.vector_store %arg4[%c0_7, %c0_8, %c0_9], %12 {strides = array<i32>} : memref<1x8x64xf32, #tpu.memory_space<vmem>>, vector<1x8x64xf32>,
    return
  }
  func.func @transform_0(%arg0: i32) -> (i32, i32) {
    %c0_i32 = arith.constant 0 : i32
    %c0_i32_0 = arith.constant 0 : i32
    %c0_i32_1 = arith.constant 0 : i32
    return %c0_i32, %c0_i32_0 : i32, i32
  }
  func.func @transform_1(%arg0: i32) -> (i32, i32, i32) {
    %c0_i32 = arith.constant 0 : i32
    %c0_i32_0 = arith.constant 0 : i32
    %c0_i32_1 = arith.constant 0 : i32
    return %arg0, %c0_i32, %c0_i32_0 : i32, i32, i32
  }
  func.func @transform_2(%arg0: i32) -> (i32, i32) {
    %c0_i32 = arith.constant 0 : i32
    %c0_i32_0 = arith.constant 0 : i32
    %c0_i32_1 = arith.constant 0 : i32
    return %c0_i32, %c0_i32_0 : i32, i32
  }
  func.func @transform_3(%arg0: i32) -> (i32, i32, i32) {
    %c0_i32 = arith.constant 0 : i32
    %c0_i32_0 = arith.constant 0 : i32
    %c0_i32_1 = arith.constant 0 : i32
    return %arg0, %c0_i32, %c0_i32_0 : i32, i32, i32
  }
}

module attributes {stable_mosaic.version = 11 : i64} {
  func.func @_fused_conv_kernel(%arg0: i32, %arg1: memref<16x128xbf16, #tpu.memory_space<vmem>>, %arg2: memref<1x128x16xbf16, #tpu.memory_space<vmem>>, %arg3: memref<16x1xf32, #tpu.memory_space<vmem>>, %arg4: memref<1x16x16xf32, #tpu.memory_space<vmem>>) attributes {dimension_semantics = [#tpu.dimension_semantics<parallel>], iteration_bounds = array<i64: 2>, scalar_prefetch = 0 : i64, scratch_operands = 0 : i64, tpu.core_type = #tpu.core_type<tc>, window_params = [{pipeline_mode = #tpu.pipeline_mode<synchronous>, transform_indices = @transform_0, window_bounds = array<i64: 16, 128>}, {transform_indices = @transform_1, window_bounds = array<i64: 1, 128, 16>}, {pipeline_mode = #tpu.pipeline_mode<synchronous>, transform_indices = @transform_2, window_bounds = array<i64: 16, 1>}, {transform_indices = @transform_3, window_bounds = array<i64: 1, 16, 16>}]} {
    %c0 = arith.constant 0 : index
    %c0_0 = arith.constant 0 : index
    %0 = vector.load %arg1[%c0, %c0_0] : memref<16x128xbf16, #tpu.memory_space<vmem>>, vector<16x128xbf16>
    %c0_1 = arith.constant 0 : index
    %c0_2 = arith.constant 0 : index
    %c0_3 = arith.constant 0 : index
    %1 = vector.load %arg2[%c0_1, %c0_2, %c0_3] : memref<1x128x16xbf16, #tpu.memory_space<vmem>>, vector<1x128x16xbf16>
    %2 = vector.shape_cast %1 : vector<1x128x16xbf16> to vector<128x16xbf16>
    %cst = arith.constant dense<0.000000e+00> : vector<16x16xf32>
    %3 = tpu.matmul %0, %2, %cst {dimension_numbers = #tpu.dot_dimension_numbers<[1], [0], [0], [1], [0, 0, 1, 1], [], []>} : vector<16x128xbf16>, vector<128x16xbf16>, vector<16x16xf32> -> vector<16x16xf32>
    %c0_4 = arith.constant 0 : index
    %c0_5 = arith.constant 0 : index
    %4 = vector.load %arg3[%c0_4, %c0_5] : memref<16x1xf32, #tpu.memory_space<vmem>>, vector<16x1xf32>
    %5 = vector.broadcast %4 : vector<16x1xf32> to vector<16x16xf32>
    %6 = arith.addf %3, %5 : vector<16x16xf32>
    %cst_6 = arith.constant dense<0.000000e+00> : vector<16xf32>
    %7 = vector.multi_reduction <add>, %6, %cst_6 [1] : vector<16x16xf32> to vector<16xf32>
    %8 = vector.shape_cast %7 : vector<16xf32> to vector<16x1xf32>
    %cst_7 = arith.constant 1.600000e+01 : f32
    %9 = vector.broadcast %cst_7 : f32 to vector<16x1xf32>
    %10 = arith.divf %8, %9 : vector<16x1xf32>
    %11 = vector.broadcast %10 : vector<16x1xf32> to vector<16x16xf32>
    %12 = arith.subf %6, %11 : vector<16x16xf32>
    %13 = arith.mulf %12, %12 : vector<16x16xf32>
    %cst_8 = arith.constant dense<0.000000e+00> : vector<16xf32>
    %14 = vector.multi_reduction <add>, %13, %cst_8 [1] : vector<16x16xf32> to vector<16xf32>
    %15 = vector.shape_cast %14 : vector<16xf32> to vector<16x1xf32>
    %cst_9 = arith.constant 1.600000e+01 : f32
    %16 = vector.broadcast %cst_9 : f32 to vector<16x1xf32>
    %17 = arith.divf %15, %16 : vector<16x1xf32>
    %18 = vector.broadcast %10 : vector<16x1xf32> to vector<16x16xf32>
    %19 = arith.subf %6, %18 : vector<16x16xf32>
    %cst_10 = arith.constant 9.99999974E-6 : f32
    %20 = vector.broadcast %cst_10 : f32 to vector<16x1xf32>
    %21 = arith.addf %17, %20 : vector<16x1xf32>
    %22 = math.rsqrt %21 : vector<16x1xf32>
    %23 = vector.broadcast %22 : vector<16x1xf32> to vector<16x16xf32>
    %24 = arith.mulf %19, %23 : vector<16x16xf32>
    %cst_11 = arith.constant 2.000000e-01 : f32
    %25 = vector.broadcast %cst_11 : f32 to vector<16x16xf32>
    %26 = arith.mulf %25, %24 : vector<16x16xf32>
    %27 = arith.maximumf %24, %26 : vector<16x16xf32>
    %c0_12 = arith.constant 0 : index
    %c0_13 = arith.constant 0 : index
    %c0_14 = arith.constant 0 : index
    %28 = vector.load %arg4[%c0_12, %c0_13, %c0_14] : memref<1x16x16xf32, #tpu.memory_space<vmem>>, vector<1x16x16xf32>
    %29 = vector.shape_cast %28 : vector<1x16x16xf32> to vector<16x16xf32>
    %30 = vector.shape_cast %27 : vector<16x16xf32> to vector<1x16x16xf32>
    tpu.vector_store %arg4[%c0_12, %c0_13, %c0_14], %30 {strides = array<i32>} : memref<1x16x16xf32, #tpu.memory_space<vmem>>, vector<1x16x16xf32>,
    return
  }
  func.func @transform_0(%arg0: i32) -> (i32, i32) {
    %c0_i32 = arith.constant 0 : i32
    %c0_i32_0 = arith.constant 0 : i32
    %c0_i32_1 = arith.constant 0 : i32
    return %c0_i32, %c0_i32_0 : i32, i32
  }
  func.func @transform_1(%arg0: i32) -> (i32, i32, i32) {
    %c0_i32 = arith.constant 0 : i32
    %c0_i32_0 = arith.constant 0 : i32
    %c0_i32_1 = arith.constant 0 : i32
    return %arg0, %c0_i32, %c0_i32_0 : i32, i32, i32
  }
  func.func @transform_2(%arg0: i32) -> (i32, i32) {
    %c0_i32 = arith.constant 0 : i32
    %c0_i32_0 = arith.constant 0 : i32
    %c0_i32_1 = arith.constant 0 : i32
    return %c0_i32, %c0_i32_0 : i32, i32
  }
  func.func @transform_3(%arg0: i32) -> (i32, i32, i32) {
    %c0_i32 = arith.constant 0 : i32
    %c0_i32_0 = arith.constant 0 : i32
    %c0_i32_1 = arith.constant 0 : i32
    return %arg0, %c0_i32, %c0_i32_0 : i32, i32, i32
  }
}

module attributes {stable_mosaic.version = 11 : i64} {
  func.func @_fused_conv_kernel(%arg0: i32, %arg1: memref<32x256xbf16, #tpu.memory_space<vmem>>, %arg2: memref<1x256x4xbf16, #tpu.memory_space<vmem>>, %arg3: memref<32x1xf32, #tpu.memory_space<vmem>>, %arg4: memref<1x32x4xf32, #tpu.memory_space<vmem>>) attributes {dimension_semantics = [#tpu.dimension_semantics<parallel>], iteration_bounds = array<i64: 2>, scalar_prefetch = 0 : i64, scratch_operands = 0 : i64, tpu.core_type = #tpu.core_type<tc>, window_params = [{pipeline_mode = #tpu.pipeline_mode<synchronous>, transform_indices = @transform_0, window_bounds = array<i64: 32, 256>}, {transform_indices = @transform_1, window_bounds = array<i64: 1, 256, 4>}, {pipeline_mode = #tpu.pipeline_mode<synchronous>, transform_indices = @transform_2, window_bounds = array<i64: 32, 1>}, {transform_indices = @transform_3, window_bounds = array<i64: 1, 32, 4>}]} {
    %c0 = arith.constant 0 : index
    %c0_0 = arith.constant 0 : index
    %0 = vector.load %arg1[%c0, %c0_0] : memref<32x256xbf16, #tpu.memory_space<vmem>>, vector<32x256xbf16>
    %c0_1 = arith.constant 0 : index
    %c0_2 = arith.constant 0 : index
    %c0_3 = arith.constant 0 : index
    %1 = vector.load %arg2[%c0_1, %c0_2, %c0_3] : memref<1x256x4xbf16, #tpu.memory_space<vmem>>, vector<1x256x4xbf16>
    %2 = vector.shape_cast %1 : vector<1x256x4xbf16> to vector<256x4xbf16>
    %cst = arith.constant dense<0.000000e+00> : vector<32x4xf32>
    %3 = tpu.matmul %0, %2, %cst {dimension_numbers = #tpu.dot_dimension_numbers<[1], [0], [0], [1], [0, 0, 1, 1], [], []>} : vector<32x256xbf16>, vector<256x4xbf16>, vector<32x4xf32> -> vector<32x4xf32>
    %c0_4 = arith.constant 0 : index
    %c0_5 = arith.constant 0 : index
    %4 = vector.load %arg3[%c0_4, %c0_5] : memref<32x1xf32, #tpu.memory_space<vmem>>, vector<32x1xf32>
    %5 = vector.broadcast %4 : vector<32x1xf32> to vector<32x4xf32>
    %6 = arith.addf %3, %5 : vector<32x4xf32>
    %cst_6 = arith.constant dense<0.000000e+00> : vector<32xf32>
    %7 = vector.multi_reduction <add>, %6, %cst_6 [1] : vector<32x4xf32> to vector<32xf32>
    %8 = vector.shape_cast %7 : vector<32xf32> to vector<32x1xf32>
    %cst_7 = arith.constant 4.000000e+00 : f32
    %9 = vector.broadcast %cst_7 : f32 to vector<32x1xf32>
    %10 = arith.divf %8, %9 : vector<32x1xf32>
    %11 = vector.broadcast %10 : vector<32x1xf32> to vector<32x4xf32>
    %12 = arith.subf %6, %11 : vector<32x4xf32>
    %13 = arith.mulf %12, %12 : vector<32x4xf32>
    %cst_8 = arith.constant dense<0.000000e+00> : vector<32xf32>
    %14 = vector.multi_reduction <add>, %13, %cst_8 [1] : vector<32x4xf32> to vector<32xf32>
    %15 = vector.shape_cast %14 : vector<32xf32> to vector<32x1xf32>
    %cst_9 = arith.constant 4.000000e+00 : f32
    %16 = vector.broadcast %cst_9 : f32 to vector<32x1xf32>
    %17 = arith.divf %15, %16 : vector<32x1xf32>
    %18 = vector.broadcast %10 : vector<32x1xf32> to vector<32x4xf32>
    %19 = arith.subf %6, %18 : vector<32x4xf32>
    %cst_10 = arith.constant 9.99999974E-6 : f32
    %20 = vector.broadcast %cst_10 : f32 to vector<32x1xf32>
    %21 = arith.addf %17, %20 : vector<32x1xf32>
    %22 = math.rsqrt %21 : vector<32x1xf32>
    %23 = vector.broadcast %22 : vector<32x1xf32> to vector<32x4xf32>
    %24 = arith.mulf %19, %23 : vector<32x4xf32>
    %cst_11 = arith.constant 2.000000e-01 : f32
    %25 = vector.broadcast %cst_11 : f32 to vector<32x4xf32>
    %26 = arith.mulf %25, %24 : vector<32x4xf32>
    %27 = arith.maximumf %24, %26 : vector<32x4xf32>
    %c0_12 = arith.constant 0 : index
    %c0_13 = arith.constant 0 : index
    %c0_14 = arith.constant 0 : index
    %28 = vector.load %arg4[%c0_12, %c0_13, %c0_14] : memref<1x32x4xf32, #tpu.memory_space<vmem>>, vector<1x32x4xf32>
    %29 = vector.shape_cast %28 : vector<1x32x4xf32> to vector<32x4xf32>
    %30 = vector.shape_cast %27 : vector<32x4xf32> to vector<1x32x4xf32>
    tpu.vector_store %arg4[%c0_12, %c0_13, %c0_14], %30 {strides = array<i32>} : memref<1x32x4xf32, #tpu.memory_space<vmem>>, vector<1x32x4xf32>,
    return
  }
  func.func @transform_0(%arg0: i32) -> (i32, i32) {
    %c0_i32 = arith.constant 0 : i32
    %c0_i32_0 = arith.constant 0 : i32
    %c0_i32_1 = arith.constant 0 : i32
    return %c0_i32, %c0_i32_0 : i32, i32
  }
  func.func @transform_1(%arg0: i32) -> (i32, i32, i32) {
    %c0_i32 = arith.constant 0 : i32
    %c0_i32_0 = arith.constant 0 : i32
    %c0_i32_1 = arith.constant 0 : i32
    return %arg0, %c0_i32, %c0_i32_0 : i32, i32, i32
  }
  func.func @transform_2(%arg0: i32) -> (i32, i32) {
    %c0_i32 = arith.constant 0 : i32
    %c0_i32_0 = arith.constant 0 : i32
    %c0_i32_1 = arith.constant 0 : i32
    return %c0_i32, %c0_i32_0 : i32, i32
  }
  func.func @transform_3(%arg0: i32) -> (i32, i32, i32) {
    %c0_i32 = arith.constant 0 : i32
    %c0_i32_0 = arith.constant 0 : i32
    %c0_i32_1 = arith.constant 0 : i32
    return %arg0, %c0_i32, %c0_i32_0 : i32, i32, i32
  }
}

module attributes {stable_mosaic.version = 11 : i64} {
  func.func @_fused_conv_kernel(%arg0: i32, %arg1: memref<8x512xbf16, #tpu.memory_space<vmem>>, %arg2: memref<1x512x1xbf16, #tpu.memory_space<vmem>>, %arg3: memref<8x1xf32, #tpu.memory_space<vmem>>, %arg4: memref<1x8x1xf32, #tpu.memory_space<vmem>>) attributes {dimension_semantics = [#tpu.dimension_semantics<parallel>], iteration_bounds = array<i64: 2>, scalar_prefetch = 0 : i64, scratch_operands = 0 : i64, tpu.core_type = #tpu.core_type<tc>, window_params = [{pipeline_mode = #tpu.pipeline_mode<synchronous>, transform_indices = @transform_0, window_bounds = array<i64: 8, 512>}, {transform_indices = @transform_1, window_bounds = array<i64: 1, 512, 1>}, {pipeline_mode = #tpu.pipeline_mode<synchronous>, transform_indices = @transform_2, window_bounds = array<i64: 8, 1>}, {transform_indices = @transform_3, window_bounds = array<i64: 1, 8, 1>}]} {
    %c0 = arith.constant 0 : index
    %c0_0 = arith.constant 0 : index
    %0 = vector.load %arg1[%c0, %c0_0] : memref<8x512xbf16, #tpu.memory_space<vmem>>, vector<8x512xbf16>
    %c0_1 = arith.constant 0 : index
    %c0_2 = arith.constant 0 : index
    %c0_3 = arith.constant 0 : index
    %1 = vector.load %arg2[%c0_1, %c0_2, %c0_3] : memref<1x512x1xbf16, #tpu.memory_space<vmem>>, vector<1x512x1xbf16>
    %2 = vector.shape_cast %1 : vector<1x512x1xbf16> to vector<512x1xbf16>
    %cst = arith.constant dense<0.000000e+00> : vector<8x1xf32>
    %3 = tpu.matmul %0, %2, %cst {dimension_numbers = #tpu.dot_dimension_numbers<[1], [0], [0], [1], [0, 0, 1, 1], [], []>} : vector<8x512xbf16>, vector<512x1xbf16>, vector<8x1xf32> -> vector<8x1xf32>
    %c0_4 = arith.constant 0 : index
    %c0_5 = arith.constant 0 : index
    %4 = vector.load %arg3[%c0_4, %c0_5] : memref<8x1xf32, #tpu.memory_space<vmem>>, vector<8x1xf32>
    %5 = arith.addf %3, %4 : vector<8x1xf32>
    %c0_6 = arith.constant 0 : index
    %c0_7 = arith.constant 0 : index
    %c0_8 = arith.constant 0 : index
    %6 = vector.load %arg4[%c0_6, %c0_7, %c0_8] : memref<1x8x1xf32, #tpu.memory_space<vmem>>, vector<1x8x1xf32>
    %7 = vector.shape_cast %6 : vector<1x8x1xf32> to vector<8x1xf32>
    %8 = vector.shape_cast %5 : vector<8x1xf32> to vector<1x8x1xf32>
    tpu.vector_store %arg4[%c0_6, %c0_7, %c0_8], %8 {strides = array<i32>} : memref<1x8x1xf32, #tpu.memory_space<vmem>>, vector<1x8x1xf32>,
    return
  }
  func.func @transform_0(%arg0: i32) -> (i32, i32) {
    %c0_i32 = arith.constant 0 : i32
    %c0_i32_0 = arith.constant 0 : i32
    %c0_i32_1 = arith.constant 0 : i32
    return %c0_i32, %c0_i32_0 : i32, i32
  }
  func.func @transform_1(%arg0: i32) -> (i32, i32, i32) {
    %c0_i32 = arith.constant 0 : i32
    %c0_i32_0 = arith.constant 0 : i32
    %c0_i32_1 = arith.constant 0 : i32
    return %arg0, %c0_i32, %c0_i32_0 : i32, i32, i32
  }
  func.func @transform_2(%arg0: i32) -> (i32, i32) {
    %c0_i32 = arith.constant 0 : i32
    %c0_i32_0 = arith.constant 0 : i32
    %c0_i32_1 = arith.constant 0 : i32
    return %c0_i32, %c0_i32_0 : i32, i32
  }
  func.func @transform_3(%arg0: i32) -> (i32, i32, i32) {
    %c0_i32 = arith.constant 0 : i32
    %c0_i32_0 = arith.constant 0 : i32
    %c0_i32_1 = arith.constant 0 : i32
    return %arg0, %c0_i32, %c0_i32_0 : i32, i32, i32
  }
}

</mosaic_0001>

<llo_original>
// kernel: discriminator_forward.4
$region0: #{discriminator_forward.4}
  #allocation0 [shape = 'u32[]', space=smem, size = 0x4, offset = 0x4, fixed_abs, tag = 'smem constant byte address 0x4 - core index']
  #allocation1 [shape = 'u32[144,128]{1,0:T(1,128)}', space=vmem, size = 0x12000, scoped, tag = 'internal scratch']
  %s0 = inlined_call_operand.vmem [shape: bf16[8,128], index: 0, kind: input, shape index: {}]
  %s1 = inlined_call_operand.vmem [shape: bf16[2,128,64], index: 1, kind: input, shape index: {}]
  %s2 = inlined_call_operand.vmem [shape: f32[8,1], index: 2, kind: input, shape index: {}]
  %s3 = inlined_call_operand.vmem [shape: f32[2,8,64], index: 3, kind: output, shape index: {}]
  %s4 = sld [smem:[#allocation0]]
  $region45: #{discriminator_forward.4} parent=0
    _
  %s6 = ssub.s32 1, %s4
  %s7 = scalar_select 0, %s6, %s4
  loop: start=0, step=1, limit=4
  $region2: #{discriminator_forward.4} parent=0 // loop_pre_header
    _
  $region3: #{discriminator_forward.4} parent=0 // loop_header
    %s9 = sphi 0, %s13
    %p10 = scmp.ge.s32.totalorder %s9, 4
    %s17 = sphi 0, %s17
    %s19 = sphi 0, %s17
    %s20 = sphi 0, %s19
    %s34 = sphi 0, %s20
    %s40 = sphi 0, %s42
    %s43 = sphi 0, %s40
    %s44 = sphi 0, %s43
    %s60 = sphi 0, %s44
    %s64 = sphi 0, %s64
    %s66 = sphi 0, %s64
    %s67 = sphi 0, %s66
    %s81 = sphi 0, %s67
    %s87 = sphi 0, %s89
    %s90 = sphi 0, %s87
    %s91 = sphi 0, %s90
    %s107 = sphi 0, %s91
  $region4: #{discriminator_forward.4} parent=0 // loop_header_branch
    %12 = sbr.rel (%p10) target = $region8
  $region5: #{discriminator_forward.4} parent=0 // loop_body
    %s14 = ssub.s32 %s9, 1
    %s15 = ssub.s32 %s9, 2
    %s16 = sadd.s32 %s9, 1
    %s18 = sadd.s32 %s17, 1
    %p21 = scmp.eq.s32.totalorder %s9, 1
    %p22 = scmp.ne.s32.totalorder %s17, %s19
    %p23 = scmp.eq.s32.totalorder %s9, 0
    %p24 = por %p22, %p23
    %p25 = scmp.ne.s32.totalorder %s17, %s19
    %p26 = scmp.eq.s32.totalorder %s14, 1
    %p27 = por %p25, %p26
    %p28 = scmp.ne.s32.totalorder %s19, %s20
    %p29 = scmp.eq.s32.totalorder %s14, 0
    %p30 = por %p28, %p29
    %p31 = scmp.ne.s32.totalorder %s19, %s20
    %p32 = scmp.eq.s32.totalorder %s15, 1
    %p33 = por %p31, %p32
    %p35 = scmp.ne.s32.totalorder %s20, %s34
    %p36 = scmp.eq.s32.totalorder %s15, 0
    %p37 = por %p35, %p36
    %s38 = ssub.s32 %s9, %s16
    %p39 = scmp.eq.s32.totalorder %s38, 0
    %s41 = sadd.s32 %s40, 1
    %s42 = scalar_select %p39, %s40, %s41
    %p45 = pneg %p39
    %p46 = scmp.eq.s32.totalorder %s9, 1
    %p47 = por %p45, %p46
    %p48 = scmp.ne.s32.totalorder %s40, %s43
    %p49 = scmp.eq.s32.totalorder %s9, 0
    %p50 = por %p48, %p49
    %p51 = scmp.ne.s32.totalorder %s40, %s43
    %p52 = scmp.eq.s32.totalorder %s14, 1
    %p53 = por %p51, %p52
    %p54 = scmp.ne.s32.totalorder %s43, %s44
    %p55 = scmp.eq.s32.totalorder %s14, 0
    %p56 = por %p54, %p55
    %p57 = scmp.ne.s32.totalorder %s43, %s44
    %p58 = scmp.eq.s32.totalorder %s15, 1
    %p59 = por %p57, %p58
    %p61 = scmp.ne.s32.totalorder %s44, %s60
    %p62 = scmp.eq.s32.totalorder %s15, 0
    %p63 = por %p61, %p62
    %s65 = sadd.s32 %s64, 1
    %p68 = scmp.eq.s32.totalorder %s9, 1
    %p69 = scmp.ne.s32.totalorder %s64, %s66
    %p70 = scmp.eq.s32.totalorder %s9, 0
    %p71 = por %p69, %p70
    %p72 = scmp.ne.s32.totalorder %s64, %s66
    %p73 = scmp.eq.s32.totalorder %s14, 1
    %p74 = por %p72, %p73
    %p75 = scmp.ne.s32.totalorder %s66, %s67
    %p76 = scmp.eq.s32.totalorder %s14, 0
    %p77 = por %p75, %p76
    %p78 = scmp.ne.s32.totalorder %s66, %s67
    %p79 = scmp.eq.s32.totalorder %s15, 1
    %p80 = por %p78, %p79
    %p82 = scmp.ne.s32.totalorder %s67, %s81
    %p83 = scmp.eq.s32.totalorder %s15, 0
    %p84 = por %p82, %p83
    %s85 = ssub.s32 %s9, %s16
    %p86 = scmp.eq.s32.totalorder %s85, 0
    %s88 = sadd.s32 %s87, 1
    %s89 = scalar_select %p86, %s87, %s88
    %p92 = pneg %p86
    %p93 = scmp.eq.s32.totalorder %s9, 1
    %p94 = por %p92, %p93
    %p95 = scmp.ne.s32.totalorder %s87, %s90
    %p96 = scmp.eq.s32.totalorder %s9, 0
    %p97 = por %p95, %p96
    %p98 = scmp.ne.s32.totalorder %s87, %s90
    %p99 = scmp.eq.s32.totalorder %s14, 1
    %p100 = por %p98, %p99
    %p101 = scmp.ne.s32.totalorder %s90, %s91
    %p102 = scmp.eq.s32.totalorder %s14, 0
    %p103 = por %p101, %p102
    %p104 = scmp.ne.s32.totalorder %s90, %s91
    %p105 = scmp.eq.s32.totalorder %s15, 1
    %p106 = por %p104, %p105
    %p108 = scmp.ne.s32.totalorder %s91, %s107
    %p109 = scmp.eq.s32.totalorder %s15, 0
    %p110 = por %p108, %p109
    %p111 = scmp.le.s32.totalorder 1, %s9
    %p112 = scmp.lt.s32.totalorder %s9, 3
    %p113 = pnand %p111, %p112
    %p114 = pneg %p113
    // Predicated region
    $region9: #{discriminator_forward.4} parent=5 // pred_check
      _
    $region10: #{discriminator_forward.4} parent=5 // pred_check_branch
      %116 = sbr.rel (%p113) target = $region12
    $region11: #{discriminator_forward.4} parent=5 // pred_region
      %s117 = ssub.s32 %s9, 1
      // Predicated region
      $region13: #{discriminator_forward.4} parent=11 // pred_check
        %p118 = pneg %p30
      $region14: #{discriminator_forward.4} parent=11 // pred_check_branch
        %120 = sbr.rel (%p118) target = $region16
      $region15: #{discriminator_forward.4} parent=11 // pred_region
        _
      $region16: #{discriminator_forward.4} parent=11 // pred_fallthru
        _
      // Predicated region
      $region17: #{discriminator_forward.4} parent=11 // pred_check
        %p121 = pneg %p77
      $region18: #{discriminator_forward.4} parent=11 // pred_check_branch
        %123 = sbr.rel (%p121) target = $region20
      $region19: #{discriminator_forward.4} parent=11 // pred_region
        _
      $region20: #{discriminator_forward.4} parent=11 // pred_fallthru
        _
    $region12: #{discriminator_forward.4} parent=5 // pred_fallthru
      _
    %p124 = scmp.lt.s32.totalorder %s9, 2
    // Predicated region
    $region21: #{discriminator_forward.4} parent=5 // pred_check
      %p125 = pneg %p124
    $region22: #{discriminator_forward.4} parent=5 // pred_check_branch
      %127 = sbr.rel (%p125) target = $region24
    $region23: #{discriminator_forward.4} parent=5 // pred_region
      // Predicated region
      $region25: #{discriminator_forward.4} parent=23 // pred_check
        %p128 = pneg %p50
      $region26: #{discriminator_forward.4} parent=23 // pred_check_branch
        %130 = sbr.rel (%p128) target = $region28
      $region27: #{discriminator_forward.4} parent=23 // pred_region
        %p131 = scmp.lt.s32.totalorder %s9, 1
        %s132 = scalar_select %p131, %s9, 1
        %s133 = smul.addr %s132, 16
        %s134 = smul.addr %s133, 4
        %s135 = scalar_lea.vmem %s1, %s134
      $region28: #{discriminator_forward.4} parent=23 // pred_fallthru
        _
    $region24: #{discriminator_forward.4} parent=5 // pred_fallthru
      _
    %p136 = scmp.le.s32.totalorder 1, %s9
    %p137 = scmp.lt.s32.totalorder %s9, 3
    %p138 = pnand %p136, %p137
    %p139 = pneg %p138
    // Predicated region
    $region29: #{discriminator_forward.4} parent=5 // pred_check
      _
    $region30: #{discriminator_forward.4} parent=5 // pred_check_branch
      %141 = sbr.rel (%p138) target = $region32
    $region31: #{discriminator_forward.4} parent=5 // pred_region
      %s142 = ssub.s32 %s9, 1
      %p143 = pneg %p30
      %p144 = pneg %p27
      %p145 = scmp.lt.s32.totalorder %s14, 1
      %s146 = scalar_select %p145, %s14, 1
      %s147 = smul.addr %s146, 16
      %s148 = smul.addr %s147, 4
      %s149 = scalar_lea.vmem %s1, %s148
      %p150 = pneg %p56
      %p151 = pneg %p53
      %p152 = pneg %p77
      %p153 = pneg %p74
      %p154 = pneg %p103
      %p155 = pneg %p100
      %p156 = scmp.lt.s32.totalorder %s14, 1
      %s157 = scalar_select %p156, %s14, 1
      %s158 = smul.addr %s157, 8
      %s159 = scalar_lea.vmem %s3, %s158
      %p160 = scmp.lt.s32.totalorder %s14, 1
      %s161 = scalar_select %p160, %s14, 1
      %s162 = smul.addr %s161, 16
      %s163 = smul.addr %s162, 4
      %s164 = scalar_lea.vmem %s1, %s163
      %p165 = scmp.lt.s32.totalorder %s14, 1
      %s166 = scalar_select %p165, %s14, 1
      %s167 = smul.addr %s166, 8
      %s168 = scalar_lea.vmem %s3, %s167
      %v170 = vld [vmem:[%s0] sm:$0xf]
      %v171 = vld [vmem:[%s164] sm:$0xf]
      %v172 = vld [vmem:[%s164 + $0x4] sm:$0xf]
      %v173 = vld [vmem:[%s164 + $0x8] sm:$0xf]
      %v174 = vld [vmem:[%s164 + $0xc] sm:$0xf]
      %v175 = vld [vmem:[%s164 + $0x10] sm:$0xf]
      %v176 = vld [vmem:[%s164 + $0x14] sm:$0xf]
      %v177 = vld [vmem:[%s164 + $0x18] sm:$0xf]
      %v178 = vld [vmem:[%s164 + $0x1c] sm:$0xf]
      %v179 = vld [vmem:[%s164 + $0x20] sm:$0xf]
      %v180 = vld [vmem:[%s164 + $0x24] sm:$0xf]
      %v181 = vld [vmem:[%s164 + $0x28] sm:$0xf]
      %v182 = vld [vmem:[%s164 + $0x2c] sm:$0xf]
      %v183 = vld [vmem:[%s164 + $0x30] sm:$0xf]
      %v184 = vld [vmem:[%s164 + $0x34] sm:$0xf]
      %v185 = vld [vmem:[%s164 + $0x38] sm:$0xf]
      %v186 = vld [vmem:[%s164 + $0x3c] sm:$0xf]
      %v187 = vld [vmem:[%s2] sm:$0xff]
      %189 = vset.pattern.permute.xlu0 0
      %190 = vperm.xlu0 %189, %v187
      %v191 = vpop.permute.xlu0 %190
      %v209 = vunpack.c.l.b16 %v171
      %v210 = vunpack.c.l.b16 %v172
      %v211 = vunpack.c.l.b16 %v173
      %v212 = vunpack.c.l.b16 %v174
      %v213 = vunpack.c.l.b16 %v175
      %v214 = vunpack.c.l.b16 %v176
      %v215 = vunpack.c.l.b16 %v177
      %v216 = vunpack.c.l.b16 %v178
      %v217 = vunpack.c.l.b16 %v179
      %v218 = vunpack.c.l.b16 %v180
      %v219 = vunpack.c.l.b16 %v181
      %v220 = vunpack.c.l.b16 %v182
      %v221 = vunpack.c.l.b16 %v183
      %v222 = vunpack.c.l.b16 %v184
      %v223 = vunpack.c.l.b16 %v185
      %v224 = vunpack.c.l.b16 %v186
      %v225 = vpack.c.b16 %v210, %v209
      %v226 = vpack.c.b16 %v212, %v211
      %v227 = vpack.c.b16 %v214, %v213
      %v228 = vpack.c.b16 %v216, %v215
      %v229 = vpack.c.b16 %v218, %v217
      %v230 = vpack.c.b16 %v220, %v219
      %v231 = vpack.c.b16 %v222, %v221
      %v232 = vpack.c.b16 %v224, %v223
      %241 = vmatprep.subr.bf16.mxu0 0
      %242 = vmatpush1.bf16.msra.mxu0 %v232
      %243 = vmatprep.subr.bf16.mxu0 0
      %244 = vmatpush1.bf16.msra.mxu0 %v231
      %245 = vmatprep.subr.bf16.mxu0 0
      %246 = vmatpush1.bf16.msra.mxu0 %v230
      %247 = vmatprep.subr.bf16.mxu0 0
      %248 = vmatpush1.bf16.msra.mxu0 %v229
      %249 = vmatprep.subr.bf16.mxu0 0
      %250 = vmatpush1.bf16.msra.mxu0 %v228
      %251 = vmatprep.subr.bf16.mxu0 0
      %252 = vmatpush1.bf16.msra.mxu0 %v227
      %253 = vmatprep.subr.bf16.mxu0 0
      %254 = vmatpush1.bf16.msra.mxu0 %v226
      %255 = vmatprep.subr.bf16.mxu0 0
      %256 = vmatpush1.bf16.msra.mxu0 %v225
      %257 = vmatprep.subr.bf16.mxu0 0
      %258 = vmatpush2.bf16.msra.mxu0 0
      %259 = vmatprep.subr.bf16.mxu0 0
      %260 = vmatpush2.bf16.msra.mxu0 0
      %261 = vmatprep.subr.bf16.mxu0 0
      %262 = vmatpush2.bf16.msra.mxu0 0
      %263 = vmatprep.subr.bf16.mxu0 0
      %264 = vmatpush2.bf16.msra.mxu0 0
      %265 = vmatprep.subr.bf16.mxu0 0
      %266 = vmatpush2.bf16.msra.mxu0 0
      %267 = vmatprep.subr.bf16.mxu0 0
      %268 = vmatpush2.bf16.msra.mxu0 0
      %269 = vmatprep.subr.bf16.mxu0 0
      %270 = vmatpush2.bf16.msra.mxu0 0
      %271 = vmatprep.subr.bf16.mxu0 0
      %272 = vmatpush2.bf16.msra.mxu0 0
      %273 = vmatprep.mubr.bf16.mxu0 0
      %274 = vmatmul.mubr.bf16.gmra.mxu0 %v170
      %v275 = vpop.f32.mrf.mxu0
      %v276 = vadd.f32 %v191, %v275
      %v277 = vpop.f32.mrf.mxu0
      %v278 = vpop.f32.mrf.mxu0
      %v279 = vpop.f32.mrf.mxu0
      %280 = vdwg.mxu0
      %v281 = vmul.f32 %v276, 0.2
      %v282 = vmax.f32 %v276, %v281
      %vm283 = vcmask 523264
      %284 = vst.msk [vmem:[%s168] sm:$0xff] %vm283, %v282
      %p285 = scmp.lt.s32.totalorder %s14, 1
      %s286 = scalar_select %p285, %s14, 1
      %s287 = smul.addr %s286, 8
      %s288 = scalar_lea.vmem %s3, %s287
      // Predicated region
      $region33: #{discriminator_forward.4} parent=31 // pred_check
        %p289 = pneg %p100
      $region34: #{discriminator_forward.4} parent=31 // pred_check_branch
        %291 = sbr.rel (%p289) target = $region36
      $region35: #{discriminator_forward.4} parent=31 // pred_region
        _
      $region36: #{discriminator_forward.4} parent=31 // pred_fallthru
        _
    $region32: #{discriminator_forward.4} parent=5 // pred_fallthru
      _
    %p292 = scmp.le.s32.totalorder 2, %s9
    // Predicated region
    $region37: #{discriminator_forward.4} parent=5 // pred_check
      %p293 = pneg %p292
    $region38: #{discriminator_forward.4} parent=5 // pred_check_branch
      %295 = sbr.rel (%p293) target = $region40
    $region39: #{discriminator_forward.4} parent=5 // pred_region
      %s296 = ssub.s32 %s9, 2
      // Predicated region
      $region41: #{discriminator_forward.4} parent=39 // pred_check
        %p297 = pneg %p106
      $region42: #{discriminator_forward.4} parent=39 // pred_check_branch
        %299 = sbr.rel (%p297) target = $region44
      $region43: #{discriminator_forward.4} parent=39 // pred_region
        %p300 = scmp.lt.s32.totalorder %s15, 1
        %s301 = scalar_select %p300, %s15, 1
        %s302 = smul.addr %s301, 8
        %s303 = scalar_lea.vmem %s3, %s302
      $region44: #{discriminator_forward.4} parent=39 // pred_fallthru
        _
    $region40: #{discriminator_forward.4} parent=5 // pred_fallthru
      _
  $region6: #{discriminator_forward.4} parent=0 // loop_footer
    %s13 = sadd.s32 1, %s9
  $region7: #{discriminator_forward.4} parent=0 // loop_footer_branch
    %8 = sbr.rel target = $region3
  $region8: #{discriminator_forward.4} parent=0 // loop_exit
    _

// kernel: discriminator_forward.5
$region0: #{discriminator_forward.5}
  #allocation0 [shape = 'u32[]', space=smem, size = 0x4, offset = 0x4, fixed_abs, tag = 'smem constant byte address 0x4 - core index']
  #allocation1 [shape = 'u32[144,128]{1,0:T(1,128)}', space=vmem, size = 0x12000, scoped, tag = 'internal scratch']
  %s0 = inlined_call_operand.vmem [shape: bf16[16,128], index: 0, kind: input, shape index: {}]
  %s1 = inlined_call_operand.vmem [shape: bf16[2,128,16], index: 1, kind: input, shape index: {}]
  %s2 = inlined_call_operand.vmem [shape: f32[16,1], index: 2, kind: input, shape index: {}]
  %s3 = inlined_call_operand.vmem [shape: f32[2,16,16], index: 3, kind: output, shape index: {}]
  %s4 = sld [smem:[#allocation0]]
  $region45: #{discriminator_forward.5} parent=0
    _
  %s6 = ssub.s32 1, %s4
  %s7 = scalar_select 0, %s6, %s4
  loop: start=0, step=1, limit=4
  $region2: #{discriminator_forward.5} parent=0 // loop_pre_header
    _
  $region3: #{discriminator_forward.5} parent=0 // loop_header
    %s9 = sphi 0, %s13
    %p10 = scmp.ge.s32.totalorder %s9, 4
    %s17 = sphi 0, %s17
    %s19 = sphi 0, %s17
    %s20 = sphi 0, %s19
    %s34 = sphi 0, %s20
    %s40 = sphi 0, %s42
    %s43 = sphi 0, %s40
    %s44 = sphi 0, %s43
    %s60 = sphi 0, %s44
    %s64 = sphi 0, %s64
    %s66 = sphi 0, %s64
    %s67 = sphi 0, %s66
    %s81 = sphi 0, %s67
    %s87 = sphi 0, %s89
    %s90 = sphi 0, %s87
    %s91 = sphi 0, %s90
    %s107 = sphi 0, %s91
  $region4: #{discriminator_forward.5} parent=0 // loop_header_branch
    %12 = sbr.rel (%p10) target = $region8
  $region5: #{discriminator_forward.5} parent=0 // loop_body
    %s14 = ssub.s32 %s9, 1
    %s15 = ssub.s32 %s9, 2
    %s16 = sadd.s32 %s9, 1
    %s18 = sadd.s32 %s17, 1
    %p21 = scmp.eq.s32.totalorder %s9, 1
    %p22 = scmp.ne.s32.totalorder %s17, %s19
    %p23 = scmp.eq.s32.totalorder %s9, 0
    %p24 = por %p22, %p23
    %p25 = scmp.ne.s32.totalorder %s17, %s19
    %p26 = scmp.eq.s32.totalorder %s14, 1
    %p27 = por %p25, %p26
    %p28 = scmp.ne.s32.totalorder %s19, %s20
    %p29 = scmp.eq.s32.totalorder %s14, 0
    %p30 = por %p28, %p29
    %p31 = scmp.ne.s32.totalorder %s19, %s20
    %p32 = scmp.eq.s32.totalorder %s15, 1
    %p33 = por %p31, %p32
    %p35 = scmp.ne.s32.totalorder %s20, %s34
    %p36 = scmp.eq.s32.totalorder %s15, 0
    %p37 = por %p35, %p36
    %s38 = ssub.s32 %s9, %s16
    %p39 = scmp.eq.s32.totalorder %s38, 0
    %s41 = sadd.s32 %s40, 1
    %s42 = scalar_select %p39, %s40, %s41
    %p45 = pneg %p39
    %p46 = scmp.eq.s32.totalorder %s9, 1
    %p47 = por %p45, %p46
    %p48 = scmp.ne.s32.totalorder %s40, %s43
    %p49 = scmp.eq.s32.totalorder %s9, 0
    %p50 = por %p48, %p49
    %p51 = scmp.ne.s32.totalorder %s40, %s43
    %p52 = scmp.eq.s32.totalorder %s14, 1
    %p53 = por %p51, %p52
    %p54 = scmp.ne.s32.totalorder %s43, %s44
    %p55 = scmp.eq.s32.totalorder %s14, 0
    %p56 = por %p54, %p55
    %p57 = scmp.ne.s32.totalorder %s43, %s44
    %p58 = scmp.eq.s32.totalorder %s15, 1
    %p59 = por %p57, %p58
    %p61 = scmp.ne.s32.totalorder %s44, %s60
    %p62 = scmp.eq.s32.totalorder %s15, 0
    %p63 = por %p61, %p62
    %s65 = sadd.s32 %s64, 1
    %p68 = scmp.eq.s32.totalorder %s9, 1
    %p69 = scmp.ne.s32.totalorder %s64, %s66
    %p70 = scmp.eq.s32.totalorder %s9, 0
    %p71 = por %p69, %p70
    %p72 = scmp.ne.s32.totalorder %s64, %s66
    %p73 = scmp.eq.s32.totalorder %s14, 1
    %p74 = por %p72, %p73
    %p75 = scmp.ne.s32.totalorder %s66, %s67
    %p76 = scmp.eq.s32.totalorder %s14, 0
    %p77 = por %p75, %p76
    %p78 = scmp.ne.s32.totalorder %s66, %s67
    %p79 = scmp.eq.s32.totalorder %s15, 1
    %p80 = por %p78, %p79
    %p82 = scmp.ne.s32.totalorder %s67, %s81
    %p83 = scmp.eq.s32.totalorder %s15, 0
    %p84 = por %p82, %p83
    %s85 = ssub.s32 %s9, %s16
    %p86 = scmp.eq.s32.totalorder %s85, 0
    %s88 = sadd.s32 %s87, 1
    %s89 = scalar_select %p86, %s87, %s88
    %p92 = pneg %p86
    %p93 = scmp.eq.s32.totalorder %s9, 1
    %p94 = por %p92, %p93
    %p95 = scmp.ne.s32.totalorder %s87, %s90
    %p96 = scmp.eq.s32.totalorder %s9, 0
    %p97 = por %p95, %p96
    %p98 = scmp.ne.s32.totalorder %s87, %s90
    %p99 = scmp.eq.s32.totalorder %s14, 1
    %p100 = por %p98, %p99
    %p101 = scmp.ne.s32.totalorder %s90, %s91
    %p102 = scmp.eq.s32.totalorder %s14, 0
    %p103 = por %p101, %p102
    %p104 = scmp.ne.s32.totalorder %s90, %s91
    %p105 = scmp.eq.s32.totalorder %s15, 1
    %p106 = por %p104, %p105
    %p108 = scmp.ne.s32.totalorder %s91, %s107
    %p109 = scmp.eq.s32.totalorder %s15, 0
    %p110 = por %p108, %p109
    %p111 = scmp.le.s32.totalorder 1, %s9
    %p112 = scmp.lt.s32.totalorder %s9, 3
    %p113 = pnand %p111, %p112
    %p114 = pneg %p113
    // Predicated region
    $region9: #{discriminator_forward.5} parent=5 // pred_check
      _
    $region10: #{discriminator_forward.5} parent=5 // pred_check_branch
      %116 = sbr.rel (%p113) target = $region12
    $region11: #{discriminator_forward.5} parent=5 // pred_region
      %s117 = ssub.s32 %s9, 1
      // Predicated region
      $region13: #{discriminator_forward.5} parent=11 // pred_check
        %p118 = pneg %p30
      $region14: #{discriminator_forward.5} parent=11 // pred_check_branch
        %120 = sbr.rel (%p118) target = $region16
      $region15: #{discriminator_forward.5} parent=11 // pred_region
        _
      $region16: #{discriminator_forward.5} parent=11 // pred_fallthru
        _
      // Predicated region
      $region17: #{discriminator_forward.5} parent=11 // pred_check
        %p121 = pneg %p77
      $region18: #{discriminator_forward.5} parent=11 // pred_check_branch
        %123 = sbr.rel (%p121) target = $region20
      $region19: #{discriminator_forward.5} parent=11 // pred_region
        _
      $region20: #{discriminator_forward.5} parent=11 // pred_fallthru
        _
    $region12: #{discriminator_forward.5} parent=5 // pred_fallthru
      _
    %p124 = scmp.lt.s32.totalorder %s9, 2
    // Predicated region
    $region21: #{discriminator_forward.5} parent=5 // pred_check
      %p125 = pneg %p124
    $region22: #{discriminator_forward.5} parent=5 // pred_check_branch
      %127 = sbr.rel (%p125) target = $region24
    $region23: #{discriminator_forward.5} parent=5 // pred_region
      // Predicated region
      $region25: #{discriminator_forward.5} parent=23 // pred_check
        %p128 = pneg %p50
      $region26: #{discriminator_forward.5} parent=23 // pred_check_branch
        %130 = sbr.rel (%p128) target = $region28
      $region27: #{discriminator_forward.5} parent=23 // pred_region
        %p131 = scmp.lt.s32.totalorder %s9, 1
        %s132 = scalar_select %p131, %s9, 1
        %s133 = smul.addr %s132, 16
        %s134 = smul.addr %s133, 4
        %s135 = scalar_lea.vmem %s1, %s134
      $region28: #{discriminator_forward.5} parent=23 // pred_fallthru
        _
    $region24: #{discriminator_forward.5} parent=5 // pred_fallthru
      _
    %p136 = scmp.le.s32.totalorder 1, %s9
    %p137 = scmp.lt.s32.totalorder %s9, 3
    %p138 = pnand %p136, %p137
    %p139 = pneg %p138
    // Predicated region
    $region29: #{discriminator_forward.5} parent=5 // pred_check
      _
    $region30: #{discriminator_forward.5} parent=5 // pred_check_branch
      %141 = sbr.rel (%p138) target = $region32
    $region31: #{discriminator_forward.5} parent=5 // pred_region
      %s142 = ssub.s32 %s9, 1
      %p143 = pneg %p30
      %p144 = pneg %p27
      %p145 = scmp.lt.s32.totalorder %s14, 1
      %s146 = scalar_select %p145, %s14, 1
      %s147 = smul.addr %s146, 16
      %s148 = smul.addr %s147, 4
      %s149 = scalar_lea.vmem %s1, %s148
      %p150 = pneg %p56
      %p151 = pneg %p53
      %p152 = pneg %p77
      %p153 = pneg %p74
      %p154 = pneg %p103
      %p155 = pneg %p100
      %p156 = scmp.lt.s32.totalorder %s14, 1
      %s157 = scalar_select %p156, %s14, 1
      %s158 = smul.addr %s157, 2
      %s159 = smul.addr %s158, 8
      %s160 = scalar_lea.vmem %s3, %s159
      %p161 = scmp.lt.s32.totalorder %s14, 1
      %s162 = scalar_select %p161, %s14, 1
      %s163 = smul.addr %s162, 16
      %s164 = smul.addr %s163, 4
      %s165 = scalar_lea.vmem %s1, %s164
      %p166 = scmp.lt.s32.totalorder %s14, 1
      %s167 = scalar_select %p166, %s14, 1
      %s168 = smul.addr %s167, 2
      %s169 = smul.addr %s168, 8
      %s170 = scalar_lea.vmem %s3, %s169
      %v172 = vld [vmem:[%s0] sm:$0xf]
      %v173 = vld [vmem:[%s0 + $0x4] sm:$0xf]
      %v174 = vld [vmem:[%s165] sm:$0xf]
      %v175 = vld [vmem:[%s165 + $0x4] sm:$0xf]
      %v176 = vld [vmem:[%s165 + $0x8] sm:$0xf]
      %v177 = vld [vmem:[%s165 + $0xc] sm:$0xf]
      %v178 = vld [vmem:[%s165 + $0x10] sm:$0xf]
      %v179 = vld [vmem:[%s165 + $0x14] sm:$0xf]
      %v180 = vld [vmem:[%s165 + $0x18] sm:$0xf]
      %v181 = vld [vmem:[%s165 + $0x1c] sm:$0xf]
      %v182 = vld [vmem:[%s165 + $0x20] sm:$0xf]
      %v183 = vld [vmem:[%s165 + $0x24] sm:$0xf]
      %v184 = vld [vmem:[%s165 + $0x28] sm:$0xf]
      %v185 = vld [vmem:[%s165 + $0x2c] sm:$0xf]
      %v186 = vld [vmem:[%s165 + $0x30] sm:$0xf]
      %v187 = vld [vmem:[%s165 + $0x34] sm:$0xf]
      %v188 = vld [vmem:[%s165 + $0x38] sm:$0xf]
      %v189 = vld [vmem:[%s165 + $0x3c] sm:$0xf]
      %v190 = vld [vmem:[%s2] sm:$0xff]
      %v191 = vld [vmem:[%s2 + $0x8] sm:$0xff]
      %193 = vset.pattern.permute.xlu0 0
      %194 = vperm.xlu0 %193, %v190
      %v195 = vpop.permute.xlu0 %194
      %198 = vset.pattern.permute.xlu0 0
      %199 = vperm.xlu0 %198, %v191
      %v200 = vpop.permute.xlu0 %199
      %v204 = vunpack.c.l.b16 %v172
      %v205 = vunpack.c.l.b16 %v173
      %v206 = vpack.c.b16 %v205, %v204
      %v224 = vunpack.c.l.b16 %v174
      %v225 = vunpack.c.l.b16 %v175
      %v226 = vunpack.c.l.b16 %v176
      %v227 = vunpack.c.l.b16 %v177
      %v228 = vunpack.c.l.b16 %v178
      %v229 = vunpack.c.l.b16 %v179
      %v230 = vunpack.c.l.b16 %v180
      %v231 = vunpack.c.l.b16 %v181
      %v232 = vunpack.c.l.b16 %v182
      %v233 = vunpack.c.l.b16 %v183
      %v234 = vunpack.c.l.b16 %v184
      %v235 = vunpack.c.l.b16 %v185
      %v236 = vunpack.c.l.b16 %v186
      %v237 = vunpack.c.l.b16 %v187
      %v238 = vunpack.c.l.b16 %v188
      %v239 = vunpack.c.l.b16 %v189
      %v240 = vpack.c.b16 %v225, %v224
      %v241 = vpack.c.b16 %v227, %v226
      %v242 = vpack.c.b16 %v229, %v228
      %v243 = vpack.c.b16 %v231, %v230
      %v244 = vpack.c.b16 %v233, %v232
      %v245 = vpack.c.b16 %v235, %v234
      %v246 = vpack.c.b16 %v237, %v236
      %v247 = vpack.c.b16 %v239, %v238
      %256 = vmatprep.subr.bf16.mxu0 0
      %257 = vmatpush1.bf16.msra.mxu0 %v247
      %258 = vmatprep.subr.bf16.mxu0 0
      %259 = vmatpush1.bf16.msra.mxu0 %v246
      %260 = vmatprep.subr.bf16.mxu0 0
      %261 = vmatpush1.bf16.msra.mxu0 %v245
      %262 = vmatprep.subr.bf16.mxu0 0
      %263 = vmatpush1.bf16.msra.mxu0 %v244
      %264 = vmatprep.subr.bf16.mxu0 0
      %265 = vmatpush1.bf16.msra.mxu0 %v243
      %266 = vmatprep.subr.bf16.mxu0 0
      %267 = vmatpush1.bf16.msra.mxu0 %v242
      %268 = vmatprep.subr.bf16.mxu0 0
      %269 = vmatpush1.bf16.msra.mxu0 %v241
      %270 = vmatprep.subr.bf16.mxu0 0
      %271 = vmatpush1.bf16.msra.mxu0 %v240
      %272 = vmatprep.subr.bf16.mxu0 0
      %273 = vmatpush2.bf16.msra.mxu0 0
      %274 = vmatprep.subr.bf16.mxu0 0
      %275 = vmatpush2.bf16.msra.mxu0 0
      %276 = vmatprep.subr.bf16.mxu0 0
      %277 = vmatpush2.bf16.msra.mxu0 0
      %278 = vmatprep.subr.bf16.mxu0 0
      %279 = vmatpush2.bf16.msra.mxu0 0
      %280 = vmatprep.subr.bf16.mxu0 0
      %281 = vmatpush2.bf16.msra.mxu0 0
      %282 = vmatprep.subr.bf16.mxu0 0
      %283 = vmatpush2.bf16.msra.mxu0 0
      %284 = vmatprep.subr.bf16.mxu0 0
      %285 = vmatpush2.bf16.msra.mxu0 0
      %286 = vmatprep.subr.bf16.mxu0 0
      %287 = vmatpush2.bf16.msra.mxu0 0
      %288 = vmatprep.mubr.bf16.mxu0 0
      %289 = vmatmul.mubr.bf16.gmra.mxu0 %v206
      %v290 = vpop.f32.mrf.mxu0
      %v291 = vadd.f32 %v195, %v290
      %v292 = vpop.f32.mrf.mxu0
      %v293 = vpop.f32.mrf.mxu0
      %v294 = vadd.f32 %v200, %v293
      %v295 = vpop.f32.mrf.mxu0
      %296 = vdwg.mxu0
      %vm297 = vcmask 130048
      %v298 = vsel %vm297, %v291, 0.0
      %299 = vadd.xlane.f32.xlu0 %v298
      %v300 = vpop.xlane.xlu0 %299
      %v301 = vsel %vm297, %v294, 0.0
      %302 = vadd.xlane.f32.xlu0 %v301
      %v303 = vpop.xlane.xlu0 %302
      %v304 = vrcp.pop 16.0
      %v305 = vmul.f32 %v300, %v304
      %v306 = vmul.f32 %v303, %v304
      %v307 = vsub.f32 %v291, %v305
      %v308 = vsub.f32 %v294, %v306
      %v309 = vmul.f32 %v307, %v307
      %v310 = vmul.f32 %v308, %v308
      %v311 = vsel %vm297, %v309, 0.0
      %312 = vadd.xlane.f32.xlu0 %v311
      %v313 = vpop.xlane.xlu0 %312
      %v314 = vsel %vm297, %v310, 0.0
      %315 = vadd.xlane.f32.xlu0 %v314
      %v316 = vpop.xlane.xlu0 %315
      %v317 = vmul.f32 %v313, %v304
      %v318 = vmul.f32 %v316, %v304
      %v319 = vadd.f32 %v317, 1e-05
      %v320 = vadd.f32 %v318, 1e-05
      %v321 = vrsqrt.pop %v319
      %v322 = vrsqrt.pop %v320
      %v323 = vmul.f32 %v307, %v321
      %v324 = vmul.f32 %v308, %v322
      %v325 = vmul.f32 %v323, 0.2
      %v326 = vmul.f32 %v324, 0.2
      %v327 = vmax.f32 %v323, %v325
      %v328 = vmax.f32 %v324, %v326
      %329 = vst.msk [vmem:[%s170] sm:$0xff] %vm297, %v327
      %330 = vst.msk [vmem:[%s170 + $0x8] sm:$0xff] %vm297, %v328
      %p331 = scmp.lt.s32.totalorder %s14, 1
      %s332 = scalar_select %p331, %s14, 1
      %s333 = smul.addr %s332, 2
      %s334 = smul.addr %s333, 8
      %s335 = scalar_lea.vmem %s3, %s334
      // Predicated region
      $region33: #{discriminator_forward.5} parent=31 // pred_check
        %p336 = pneg %p100
      $region34: #{discriminator_forward.5} parent=31 // pred_check_branch
        %338 = sbr.rel (%p336) target = $region36
      $region35: #{discriminator_forward.5} parent=31 // pred_region
        _
      $region36: #{discriminator_forward.5} parent=31 // pred_fallthru
        _
    $region32: #{discriminator_forward.5} parent=5 // pred_fallthru
      _
    %p339 = scmp.le.s32.totalorder 2, %s9
    // Predicated region
    $region37: #{discriminator_forward.5} parent=5 // pred_check
      %p340 = pneg %p339
    $region38: #{discriminator_forward.5} parent=5 // pred_check_branch
      %342 = sbr.rel (%p340) target = $region40
    $region39: #{discriminator_forward.5} parent=5 // pred_region
      %s343 = ssub.s32 %s9, 2
      // Predicated region
      $region41: #{discriminator_forward.5} parent=39 // pred_check
        %p344 = pneg %p106
      $region42: #{discriminator_forward.5} parent=39 // pred_check_branch
        %346 = sbr.rel (%p344) target = $region44
      $region43: #{discriminator_forward.5} parent=39 // pred_region
        %p347 = scmp.lt.s32.totalorder %s15, 1
        %s348 = scalar_select %p347, %s15, 1
        %s349 = smul.addr %s348, 2
        %s350 = smul.addr %s349, 8
        %s351 = scalar_lea.vmem %s3, %s350
      $region44: #{discriminator_forward.5} parent=39 // pred_fallthru
        _
    $region40: #{discriminator_forward.5} parent=5 // pred_fallthru
      _
  $region6: #{discriminator_forward.5} parent=0 // loop_footer
    %s13 = sadd.s32 1, %s9
  $region7: #{discriminator_forward.5} parent=0 // loop_footer_branch
    %8 = sbr.rel target = $region3
  $region8: #{discriminator_forward.5} parent=0 // loop_exit
    _

// kernel: discriminator_forward.6
$region0: #{discriminator_forward.6}
  #allocation0 [shape = 'u32[]', space=smem, size = 0x4, offset = 0x4, fixed_abs, tag = 'smem constant byte address 0x4 - core index']
  #allocation1 [shape = 'u32[144,128]{1,0:T(1,128)}', space=vmem, size = 0x12000, scoped, tag = 'internal scratch']
  %s0 = inlined_call_operand.vmem [shape: bf16[32,256], index: 0, kind: input, shape index: {}]
  %s1 = inlined_call_operand.vmem [shape: bf16[2,256,4], index: 1, kind: input, shape index: {}]
  %s2 = inlined_call_operand.vmem [shape: f32[32,1], index: 2, kind: input, shape index: {}]
  %s3 = inlined_call_operand.vmem [shape: f32[2,32,4], index: 3, kind: output, shape index: {}]
  %s4 = sld [smem:[#allocation0]]
  $region45: #{discriminator_forward.6} parent=0
    _
  %s6 = ssub.s32 1, %s4
  %s7 = scalar_select 0, %s6, %s4
  loop: start=0, step=1, limit=4
  $region2: #{discriminator_forward.6} parent=0 // loop_pre_header
    _
  $region3: #{discriminator_forward.6} parent=0 // loop_header
    %s9 = sphi 0, %s13
    %p10 = scmp.ge.s32.totalorder %s9, 4
    %s17 = sphi 0, %s17
    %s19 = sphi 0, %s17
    %s20 = sphi 0, %s19
    %s34 = sphi 0, %s20
    %s40 = sphi 0, %s42
    %s43 = sphi 0, %s40
    %s44 = sphi 0, %s43
    %s60 = sphi 0, %s44
    %s64 = sphi 0, %s64
    %s66 = sphi 0, %s64
    %s67 = sphi 0, %s66
    %s81 = sphi 0, %s67
    %s87 = sphi 0, %s89
    %s90 = sphi 0, %s87
    %s91 = sphi 0, %s90
    %s107 = sphi 0, %s91
  $region4: #{discriminator_forward.6} parent=0 // loop_header_branch
    %12 = sbr.rel (%p10) target = $region8
  $region5: #{discriminator_forward.6} parent=0 // loop_body
    %s14 = ssub.s32 %s9, 1
    %s15 = ssub.s32 %s9, 2
    %s16 = sadd.s32 %s9, 1
    %s18 = sadd.s32 %s17, 1
    %p21 = scmp.eq.s32.totalorder %s9, 1
    %p22 = scmp.ne.s32.totalorder %s17, %s19
    %p23 = scmp.eq.s32.totalorder %s9, 0
    %p24 = por %p22, %p23
    %p25 = scmp.ne.s32.totalorder %s17, %s19
    %p26 = scmp.eq.s32.totalorder %s14, 1
    %p27 = por %p25, %p26
    %p28 = scmp.ne.s32.totalorder %s19, %s20
    %p29 = scmp.eq.s32.totalorder %s14, 0
    %p30 = por %p28, %p29
    %p31 = scmp.ne.s32.totalorder %s19, %s20
    %p32 = scmp.eq.s32.totalorder %s15, 1
    %p33 = por %p31, %p32
    %p35 = scmp.ne.s32.totalorder %s20, %s34
    %p36 = scmp.eq.s32.totalorder %s15, 0
    %p37 = por %p35, %p36
    %s38 = ssub.s32 %s9, %s16
    %p39 = scmp.eq.s32.totalorder %s38, 0
    %s41 = sadd.s32 %s40, 1
    %s42 = scalar_select %p39, %s40, %s41
    %p45 = pneg %p39
    %p46 = scmp.eq.s32.totalorder %s9, 1
    %p47 = por %p45, %p46
    %p48 = scmp.ne.s32.totalorder %s40, %s43
    %p49 = scmp.eq.s32.totalorder %s9, 0
    %p50 = por %p48, %p49
    %p51 = scmp.ne.s32.totalorder %s40, %s43
    %p52 = scmp.eq.s32.totalorder %s14, 1
    %p53 = por %p51, %p52
    %p54 = scmp.ne.s32.totalorder %s43, %s44
    %p55 = scmp.eq.s32.totalorder %s14, 0
    %p56 = por %p54, %p55
    %p57 = scmp.ne.s32.totalorder %s43, %s44
    %p58 = scmp.eq.s32.totalorder %s15, 1
    %p59 = por %p57, %p58
    %p61 = scmp.ne.s32.totalorder %s44, %s60
    %p62 = scmp.eq.s32.totalorder %s15, 0
    %p63 = por %p61, %p62
    %s65 = sadd.s32 %s64, 1
    %p68 = scmp.eq.s32.totalorder %s9, 1
    %p69 = scmp.ne.s32.totalorder %s64, %s66
    %p70 = scmp.eq.s32.totalorder %s9, 0
    %p71 = por %p69, %p70
    %p72 = scmp.ne.s32.totalorder %s64, %s66
    %p73 = scmp.eq.s32.totalorder %s14, 1
    %p74 = por %p72, %p73
    %p75 = scmp.ne.s32.totalorder %s66, %s67
    %p76 = scmp.eq.s32.totalorder %s14, 0
    %p77 = por %p75, %p76
    %p78 = scmp.ne.s32.totalorder %s66, %s67
    %p79 = scmp.eq.s32.totalorder %s15, 1
    %p80 = por %p78, %p79
    %p82 = scmp.ne.s32.totalorder %s67, %s81
    %p83 = scmp.eq.s32.totalorder %s15, 0
    %p84 = por %p82, %p83
    %s85 = ssub.s32 %s9, %s16
    %p86 = scmp.eq.s32.totalorder %s85, 0
    %s88 = sadd.s32 %s87, 1
    %s89 = scalar_select %p86, %s87, %s88
    %p92 = pneg %p86
    %p93 = scmp.eq.s32.totalorder %s9, 1
    %p94 = por %p92, %p93
    %p95 = scmp.ne.s32.totalorder %s87, %s90
    %p96 = scmp.eq.s32.totalorder %s9, 0
    %p97 = por %p95, %p96
    %p98 = scmp.ne.s32.totalorder %s87, %s90
    %p99 = scmp.eq.s32.totalorder %s14, 1
    %p100 = por %p98, %p99
    %p101 = scmp.ne.s32.totalorder %s90, %s91
    %p102 = scmp.eq.s32.totalorder %s14, 0
    %p103 = por %p101, %p102
    %p104 = scmp.ne.s32.totalorder %s90, %s91
    %p105 = scmp.eq.s32.totalorder %s15, 1
    %p106 = por %p104, %p105
    %p108 = scmp.ne.s32.totalorder %s91, %s107
    %p109 = scmp.eq.s32.totalorder %s15, 0
    %p110 = por %p108, %p109
    %p111 = scmp.le.s32.totalorder 1, %s9
    %p112 = scmp.lt.s32.totalorder %s9, 3
    %p113 = pnand %p111, %p112
    %p114 = pneg %p113
    // Predicated region
    $region9: #{discriminator_forward.6} parent=5 // pred_check
      _
    $region10: #{discriminator_forward.6} parent=5 // pred_check_branch
      %116 = sbr.rel (%p113) target = $region12
    $region11: #{discriminator_forward.6} parent=5 // pred_region
      %s117 = ssub.s32 %s9, 1
      // Predicated region
      $region13: #{discriminator_forward.6} parent=11 // pred_check
        %p118 = pneg %p30
      $region14: #{discriminator_forward.6} parent=11 // pred_check_branch
        %120 = sbr.rel (%p118) target = $region16
      $region15: #{discriminator_forward.6} parent=11 // pred_region
        _
      $region16: #{discriminator_forward.6} parent=11 // pred_fallthru
        _
      // Predicated region
      $region17: #{discriminator_forward.6} parent=11 // pred_check
        %p121 = pneg %p77
      $region18: #{discriminator_forward.6} parent=11 // pred_check_branch
        %123 = sbr.rel (%p121) target = $region20
      $region19: #{discriminator_forward.6} parent=11 // pred_region
        _
      $region20: #{discriminator_forward.6} parent=11 // pred_fallthru
        _
    $region12: #{discriminator_forward.6} parent=5 // pred_fallthru
      _
    %p124 = scmp.lt.s32.totalorder %s9, 2
    // Predicated region
    $region21: #{discriminator_forward.6} parent=5 // pred_check
      %p125 = pneg %p124
    $region22: #{discriminator_forward.6} parent=5 // pred_check_branch
      %127 = sbr.rel (%p125) target = $region24
    $region23: #{discriminator_forward.6} parent=5 // pred_region
      // Predicated region
      $region25: #{discriminator_forward.6} parent=23 // pred_check
        %p128 = pneg %p50
      $region26: #{discriminator_forward.6} parent=23 // pred_check_branch
        %130 = sbr.rel (%p128) target = $region28
      $region27: #{discriminator_forward.6} parent=23 // pred_region
        %p131 = scmp.lt.s32.totalorder %s9, 1
        %s132 = scalar_select %p131, %s9, 1
        %s133 = smul.addr %s132, 32
        %s134 = smul.addr %s133, 4
        %s135 = scalar_lea.vmem %s1, %s134
      $region28: #{discriminator_forward.6} parent=23 // pred_fallthru
        _
    $region24: #{discriminator_forward.6} parent=5 // pred_fallthru
      _
    %p136 = scmp.le.s32.totalorder 1, %s9
    %p137 = scmp.lt.s32.totalorder %s9, 3
    %p138 = pnand %p136, %p137
    %p139 = pneg %p138
    // Predicated region
    $region29: #{discriminator_forward.6} parent=5 // pred_check
      _
    $region30: #{discriminator_forward.6} parent=5 // pred_check_branch
      %141 = sbr.rel (%p138) target = $region32
    $region31: #{discriminator_forward.6} parent=5 // pred_region
      %s142 = ssub.s32 %s9, 1
      %p143 = pneg %p30
      %p144 = pneg %p27
      %p145 = scmp.lt.s32.totalorder %s14, 1
      %s146 = scalar_select %p145, %s14, 1
      %s147 = smul.addr %s146, 32
      %s148 = smul.addr %s147, 4
      %s149 = scalar_lea.vmem %s1, %s148
      %p150 = pneg %p56
      %p151 = pneg %p53
      %p152 = pneg %p77
      %p153 = pneg %p74
      %p154 = pneg %p103
      %p155 = pneg %p100
      %p156 = scmp.lt.s32.totalorder %s14, 1
      %s157 = scalar_select %p156, %s14, 1
      %s158 = smul.addr %s157, 4
      %s159 = smul.addr %s158, 8
      %s160 = scalar_lea.vmem %s3, %s159
      %p161 = scmp.lt.s32.totalorder %s14, 1
      %s162 = scalar_select %p161, %s14, 1
      %s163 = smul.addr %s162, 32
      %s164 = smul.addr %s163, 4
      %s165 = scalar_lea.vmem %s1, %s164
      %p166 = scmp.lt.s32.totalorder %s14, 1
      %s167 = scalar_select %p166, %s14, 1
      %s168 = smul.addr %s167, 4
      %s169 = smul.addr %s168, 8
      %s170 = scalar_lea.vmem %s3, %s169
      %v172 = vld [vmem:[%s0] sm:$0xff]
      %v173 = vld [vmem:[%s0 + $0x8] sm:$0xff]
      %v174 = vld [vmem:[%s0 + $0x10] sm:$0xff]
      %v175 = vld [vmem:[%s0 + $0x18] sm:$0xff]
      %v176 = vld [vmem:[%s165] sm:$0xf]
      %v177 = vld [vmem:[%s165 + $0x4] sm:$0xf]
      %v178 = vld [vmem:[%s165 + $0x8] sm:$0xf]
      %v179 = vld [vmem:[%s165 + $0xc] sm:$0xf]
      %v180 = vld [vmem:[%s165 + $0x10] sm:$0xf]
      %v181 = vld [vmem:[%s165 + $0x14] sm:$0xf]
      %v182 = vld [vmem:[%s165 + $0x18] sm:$0xf]
      %v183 = vld [vmem:[%s165 + $0x1c] sm:$0xf]
      %v184 = vld [vmem:[%s165 + $0x20] sm:$0xf]
      %v185 = vld [vmem:[%s165 + $0x24] sm:$0xf]
      %v186 = vld [vmem:[%s165 + $0x28] sm:$0xf]
      %v187 = vld [vmem:[%s165 + $0x2c] sm:$0xf]
      %v188 = vld [vmem:[%s165 + $0x30] sm:$0xf]
      %v189 = vld [vmem:[%s165 + $0x34] sm:$0xf]
      %v190 = vld [vmem:[%s165 + $0x38] sm:$0xf]
      %v191 = vld [vmem:[%s165 + $0x3c] sm:$0xf]
      %v192 = vld [vmem:[%s165 + $0x40] sm:$0xf]
      %v193 = vld [vmem:[%s165 + $0x44] sm:$0xf]
      %v194 = vld [vmem:[%s165 + $0x48] sm:$0xf]
      %v195 = vld [vmem:[%s165 + $0x4c] sm:$0xf]
      %v196 = vld [vmem:[%s165 + $0x50] sm:$0xf]
      %v197 = vld [vmem:[%s165 + $0x54] sm:$0xf]
      %v198 = vld [vmem:[%s165 + $0x58] sm:$0xf]
      %v199 = vld [vmem:[%s165 + $0x5c] sm:$0xf]
      %v200 = vld [vmem:[%s165 + $0x60] sm:$0xf]
      %v201 = vld [vmem:[%s165 + $0x64] sm:$0xf]
      %v202 = vld [vmem:[%s165 + $0x68] sm:$0xf]
      %v203 = vld [vmem:[%s165 + $0x6c] sm:$0xf]
      %v204 = vld [vmem:[%s165 + $0x70] sm:$0xf]
      %v205 = vld [vmem:[%s165 + $0x74] sm:$0xf]
      %v206 = vld [vmem:[%s165 + $0x78] sm:$0xf]
      %v207 = vld [vmem:[%s165 + $0x7c] sm:$0xf]
      %v208 = vld [vmem:[%s2] sm:$0xff]
      %v209 = vld [vmem:[%s2 + $0x8] sm:$0xff]
      %v210 = vld [vmem:[%s2 + $0x10] sm:$0xff]
      %v211 = vld [vmem:[%s2 + $0x18] sm:$0xff]
      %213 = vset.pattern.permute.xlu0 0
      %214 = vperm.xlu0 %213, %v208
      %v215 = vpop.permute.xlu0 %214
      %218 = vset.pattern.permute.xlu0 0
      %219 = vperm.xlu0 %218, %v209
      %v220 = vpop.permute.xlu0 %219
      %223 = vset.pattern.permute.xlu0 0
      %224 = vperm.xlu0 %223, %v210
      %v225 = vpop.permute.xlu0 %224
      %228 = vset.pattern.permute.xlu0 0
      %229 = vperm.xlu0 %228, %v211
      %v230 = vpop.permute.xlu0 %229
      %v236 = vunpack.c.l.b16 %v172
      %v237 = vunpack.c.h.b16 %v172
      %v238 = vunpack.c.l.b16 %v173
      %v239 = vunpack.c.h.b16 %v173
      %v240 = vunpack.c.l.b16 %v174
      %v241 = vunpack.c.h.b16 %v174
      %v242 = vunpack.c.l.b16 %v175
      %v243 = vunpack.c.h.b16 %v175
      %v244 = vpack.c.b16 %v238, %v236
      %v245 = vpack.c.b16 %v239, %v237
      %v246 = vpack.c.b16 %v242, %v240
      %v247 = vpack.c.b16 %v243, %v241
      %v284 = vunpack.c.l.b16 %v176
      %v285 = vunpack.c.l.b16 %v177
      %v286 = vunpack.c.l.b16 %v178
      %v287 = vunpack.c.l.b16 %v179
      %v288 = vunpack.c.l.b16 %v180
      %v289 = vunpack.c.l.b16 %v181
      %v290 = vunpack.c.l.b16 %v182
      %v291 = vunpack.c.l.b16 %v183
      %v292 = vunpack.c.l.b16 %v184
      %v293 = vunpack.c.l.b16 %v185
      %v294 = vunpack.c.l.b16 %v186
      %v295 = vunpack.c.l.b16 %v187
      %v296 = vunpack.c.l.b16 %v188
      %v297 = vunpack.c.l.b16 %v189
      %v298 = vunpack.c.l.b16 %v190
      %v299 = vunpack.c.l.b16 %v191
      %v300 = vunpack.c.l.b16 %v192
      %v301 = vunpack.c.l.b16 %v193
      %v302 = vunpack.c.l.b16 %v194
      %v303 = vunpack.c.l.b16 %v195
      %v304 = vunpack.c.l.b16 %v196
      %v305 = vunpack.c.l.b16 %v197
      %v306 = vunpack.c.l.b16 %v198
      %v307 = vunpack.c.l.b16 %v199
      %v308 = vunpack.c.l.b16 %v200
      %v309 = vunpack.c.l.b16 %v201
      %v310 = vunpack.c.l.b16 %v202
      %v311 = vunpack.c.l.b16 %v203
      %v312 = vunpack.c.l.b16 %v204
      %v313 = vunpack.c.l.b16 %v205
      %v314 = vunpack.c.l.b16 %v206
      %v315 = vunpack.c.l.b16 %v207
      %v316 = vpack.c.b16 %v285, %v284
      %v317 = vpack.c.b16 %v287, %v286
      %v318 = vpack.c.b16 %v289, %v288
      %v319 = vpack.c.b16 %v291, %v290
      %v320 = vpack.c.b16 %v293, %v292
      %v321 = vpack.c.b16 %v295, %v294
      %v322 = vpack.c.b16 %v297, %v296
      %v323 = vpack.c.b16 %v299, %v298
      %v324 = vpack.c.b16 %v301, %v300
      %v325 = vpack.c.b16 %v303, %v302
      %v326 = vpack.c.b16 %v305, %v304
      %v327 = vpack.c.b16 %v307, %v306
      %v328 = vpack.c.b16 %v309, %v308
      %v329 = vpack.c.b16 %v311, %v310
      %v330 = vpack.c.b16 %v313, %v312
      %v331 = vpack.c.b16 %v315, %v314
      %348 = vmatprep.subr.bf16.mxu0 0
      %349 = vmatpush1.bf16.msra.mxu0 %v323
      %350 = vmatprep.subr.bf16.mxu0 0
      %351 = vmatpush1.bf16.msra.mxu0 %v322
      %352 = vmatprep.subr.bf16.mxu0 0
      %353 = vmatpush1.bf16.msra.mxu0 %v321
      %354 = vmatprep.subr.bf16.mxu0 0
      %355 = vmatpush1.bf16.msra.mxu0 %v320
      %356 = vmatprep.subr.bf16.mxu0 0
      %357 = vmatpush1.bf16.msra.mxu0 %v319
      %358 = vmatprep.subr.bf16.mxu0 0
      %359 = vmatpush1.bf16.msra.mxu0 %v318
      %360 = vmatprep.subr.bf16.mxu0 0
      %361 = vmatpush1.bf16.msra.mxu0 %v317
      %362 = vmatprep.subr.bf16.mxu0 0
      %363 = vmatpush1.bf16.msra.mxu0 %v316
      %364 = vmatprep.subr.bf16.mxu0 0
      %365 = vmatpush2.bf16.msra.mxu0 %v331
      %366 = vmatprep.subr.bf16.mxu0 0
      %367 = vmatpush2.bf16.msra.mxu0 %v330
      %368 = vmatprep.subr.bf16.mxu0 0
      %369 = vmatpush2.bf16.msra.mxu0 %v329
      %370 = vmatprep.subr.bf16.mxu0 0
      %371 = vmatpush2.bf16.msra.mxu0 %v328
      %372 = vmatprep.subr.bf16.mxu0 0
      %373 = vmatpush2.bf16.msra.mxu0 %v327
      %374 = vmatprep.subr.bf16.mxu0 0
      %375 = vmatpush2.bf16.msra.mxu0 %v326
      %376 = vmatprep.subr.bf16.mxu0 0
      %377 = vmatpush2.bf16.msra.mxu0 %v325
      %378 = vmatprep.subr.bf16.mxu0 0
      %379 = vmatpush2.bf16.msra.mxu0 %v324
      %380 = vmatprep.mubr.bf16.mxu0 %v245
      %381 = vmatmul.mubr.bf16.gmra.mxu0 %v244
      %v382 = vpop.f32.mrf.mxu0
      %v383 = vadd.f32 %v215, %v382
      %v384 = vpop.f32.mrf.mxu0
      %v385 = vpop.f32.mrf.mxu0
      %v386 = vadd.f32 %v220, %v385
      %v387 = vpop.f32.mrf.mxu0
      %388 = vmatprep.mubr.bf16.mxu0 %v247
      %389 = vmatmul.mubr.bf16.gmra.mxu0 %v246
      %v390 = vpop.f32.mrf.mxu0
      %v391 = vadd.f32 %v225, %v390
      %v392 = vpop.f32.mrf.mxu0
      %v393 = vpop.f32.mrf.mxu0
      %v394 = vadd.f32 %v230, %v393
      %v395 = vpop.f32.mrf.mxu0
      %396 = vdwg.mxu0
      %vm397 = vcmask 31744
      %v398 = vsel %vm397, %v383, 0.0
      %399 = vadd.xlane.f32.xlu0 %v398
      %v400 = vpop.xlane.xlu0 %399
      %v401 = vsel %vm397, %v386, 0.0
      %402 = vadd.xlane.f32.xlu0 %v401
      %v403 = vpop.xlane.xlu0 %402
      %v404 = vsel %vm397, %v391, 0.0
      %405 = vadd.xlane.f32.xlu0 %v404
      %v406 = vpop.xlane.xlu0 %405
      %v407 = vsel %vm397, %v394, 0.0
      %408 = vadd.xlane.f32.xlu0 %v407
      %v409 = vpop.xlane.xlu0 %408
      %v410 = vrcp.pop 4.0
      %v411 = vmul.f32 %v400, %v410
      %v412 = vmul.f32 %v403, %v410
      %v413 = vmul.f32 %v406, %v410
      %v414 = vmul.f32 %v409, %v410
      %v415 = vsub.f32 %v383, %v411
      %v416 = vsub.f32 %v386, %v412
      %v417 = vsub.f32 %v391, %v413
      %v418 = vsub.f32 %v394, %v414
      %v419 = vmul.f32 %v415, %v415
      %v420 = vmul.f32 %v416, %v416
      %v421 = vmul.f32 %v417, %v417
      %v422 = vmul.f32 %v418, %v418
      %v423 = vsel %vm397, %v419, 0.0
      %424 = vadd.xlane.f32.xlu0 %v423
      %v425 = vpop.xlane.xlu0 %424
      %v426 = vsel %vm397, %v420, 0.0
      %427 = vadd.xlane.f32.xlu0 %v426
      %v428 = vpop.xlane.xlu0 %427
      %v429 = vsel %vm397, %v421, 0.0
      %430 = vadd.xlane.f32.xlu0 %v429
      %v431 = vpop.xlane.xlu0 %430
      %v432 = vsel %vm397, %v422, 0.0
      %433 = vadd.xlane.f32.xlu0 %v432
      %v434 = vpop.xlane.xlu0 %433
      %v435 = vmul.f32 %v425, %v410
      %v436 = vmul.f32 %v428, %v410
      %v437 = vmul.f32 %v431, %v410
      %v438 = vmul.f32 %v434, %v410
      %v439 = vadd.f32 %v435, 1e-05
      %v440 = vadd.f32 %v436, 1e-05
      %v441 = vadd.f32 %v437, 1e-05
      %v442 = vadd.f32 %v438, 1e-05
      %v443 = vrsqrt.pop %v439
      %v444 = vrsqrt.pop %v440
      %v445 = vrsqrt.pop %v441
      %v446 = vrsqrt.pop %v442
      %v447 = vmul.f32 %v415, %v443
      %v448 = vmul.f32 %v416, %v444
      %v449 = vmul.f32 %v417, %v445
      %v450 = vmul.f32 %v418, %v446
      %v451 = vmul.f32 %v447, 0.2
      %v452 = vmul.f32 %v448, 0.2
      %v453 = vmul.f32 %v449, 0.2
      %v454 = vmul.f32 %v450, 0.2
      %v455 = vmax.f32 %v447, %v451
      %v456 = vmax.f32 %v448, %v452
      %v457 = vmax.f32 %v449, %v453
      %v458 = vmax.f32 %v450, %v454
      %459 = vst.msk [vmem:[%s170] sm:$0xff] %vm397, %v455
      %460 = vst.msk [vmem:[%s170 + $0x8] sm:$0xff] %vm397, %v456
      %461 = vst.msk [vmem:[%s170 + $0x10] sm:$0xff] %vm397, %v457
      %462 = vst.msk [vmem:[%s170 + $0x18] sm:$0xff] %vm397, %v458
      %p463 = scmp.lt.s32.totalorder %s14, 1
      %s464 = scalar_select %p463, %s14, 1
      %s465 = smul.addr %s464, 4
      %s466 = smul.addr %s465, 8
      %s467 = scalar_lea.vmem %s3, %s466
      // Predicated region
      $region33: #{discriminator_forward.6} parent=31 // pred_check
        %p468 = pneg %p100
      $region34: #{discriminator_forward.6} parent=31 // pred_check_branch
        %470 = sbr.rel (%p468) target = $region36
      $region35: #{discriminator_forward.6} parent=31 // pred_region
        _
      $region36: #{discriminator_forward.6} parent=31 // pred_fallthru
        _
    $region32: #{discriminator_forward.6} parent=5 // pred_fallthru
      _
    %p471 = scmp.le.s32.totalorder 2, %s9
    // Predicated region
    $region37: #{discriminator_forward.6} parent=5 // pred_check
      %p472 = pneg %p471
    $region38: #{discriminator_forward.6} parent=5 // pred_check_branch
      %474 = sbr.rel (%p472) target = $region40
    $region39: #{discriminator_forward.6} parent=5 // pred_region
      %s475 = ssub.s32 %s9, 2
      // Predicated region
      $region41: #{discriminator_forward.6} parent=39 // pred_check
        %p476 = pneg %p106
      $region42: #{discriminator_forward.6} parent=39 // pred_check_branch
        %478 = sbr.rel (%p476) target = $region44
      $region43: #{discriminator_forward.6} parent=39 // pred_region
        %p479 = scmp.lt.s32.totalorder %s15, 1
        %s480 = scalar_select %p479, %s15, 1
        %s481 = smul.addr %s480, 4
        %s482 = smul.addr %s481, 8
        %s483 = scalar_lea.vmem %s3, %s482
      $region44: #{discriminator_forward.6} parent=39 // pred_fallthru
        _
    $region40: #{discriminator_forward.6} parent=5 // pred_fallthru
      _
  $region6: #{discriminator_forward.6} parent=0 // loop_footer
    %s13 = sadd.s32 1, %s9
  $region7: #{discriminator_forward.6} parent=0 // loop_footer_branch
    %8 = sbr.rel target = $region3
  $region8: #{discriminator_forward.6} parent=0 // loop_exit
    _

// kernel: discriminator_forward.7
$region0: #{discriminator_forward.7}
  #allocation0 [shape = 'u32[]', space=smem, size = 0x4, offset = 0x4, fixed_abs, tag = 'smem constant byte address 0x4 - core index']
  #allocation1 [shape = 'u32[144,128]{1,0:T(1,128)}', space=vmem, size = 0x12000, scoped, tag = 'internal scratch']
  %s0 = inlined_call_operand.vmem [shape: bf16[8,512], index: 0, kind: input, shape index: {}]
  %s1 = inlined_call_operand.vmem [shape: bf16[2,512,1], index: 1, kind: input, shape index: {}]
  %s2 = inlined_call_operand.vmem [shape: f32[8,1], index: 2, kind: input, shape index: {}]
  %s3 = inlined_call_operand.vmem [shape: f32[2,8,1], index: 3, kind: output, shape index: {}]
  %s4 = sld [smem:[#allocation0]]
  $region45: #{discriminator_forward.7} parent=0
    _
  %s6 = ssub.s32 1, %s4
  %s7 = scalar_select 0, %s6, %s4
  loop: start=0, step=1, limit=4
  $region2: #{discriminator_forward.7} parent=0 // loop_pre_header
    _
  $region3: #{discriminator_forward.7} parent=0 // loop_header
    %s9 = sphi 0, %s13
    %p10 = scmp.ge.s32.totalorder %s9, 4
    %s17 = sphi 0, %s17
    %s19 = sphi 0, %s17
    %s20 = sphi 0, %s19
    %s34 = sphi 0, %s20
    %s40 = sphi 0, %s42
    %s43 = sphi 0, %s40
    %s44 = sphi 0, %s43
    %s60 = sphi 0, %s44
    %s64 = sphi 0, %s64
    %s66 = sphi 0, %s64
    %s67 = sphi 0, %s66
    %s81 = sphi 0, %s67
    %s87 = sphi 0, %s89
    %s90 = sphi 0, %s87
    %s91 = sphi 0, %s90
    %s107 = sphi 0, %s91
  $region4: #{discriminator_forward.7} parent=0 // loop_header_branch
    %12 = sbr.rel (%p10) target = $region8
  $region5: #{discriminator_forward.7} parent=0 // loop_body
    %s14 = ssub.s32 %s9, 1
    %s15 = ssub.s32 %s9, 2
    %s16 = sadd.s32 %s9, 1
    %s18 = sadd.s32 %s17, 1
    %p21 = scmp.eq.s32.totalorder %s9, 1
    %p22 = scmp.ne.s32.totalorder %s17, %s19
    %p23 = scmp.eq.s32.totalorder %s9, 0
    %p24 = por %p22, %p23
    %p25 = scmp.ne.s32.totalorder %s17, %s19
    %p26 = scmp.eq.s32.totalorder %s14, 1
    %p27 = por %p25, %p26
    %p28 = scmp.ne.s32.totalorder %s19, %s20
    %p29 = scmp.eq.s32.totalorder %s14, 0
    %p30 = por %p28, %p29
    %p31 = scmp.ne.s32.totalorder %s19, %s20
    %p32 = scmp.eq.s32.totalorder %s15, 1
    %p33 = por %p31, %p32
    %p35 = scmp.ne.s32.totalorder %s20, %s34
    %p36 = scmp.eq.s32.totalorder %s15, 0
    %p37 = por %p35, %p36
    %s38 = ssub.s32 %s9, %s16
    %p39 = scmp.eq.s32.totalorder %s38, 0
    %s41 = sadd.s32 %s40, 1
    %s42 = scalar_select %p39, %s40, %s41
    %p45 = pneg %p39
    %p46 = scmp.eq.s32.totalorder %s9, 1
    %p47 = por %p45, %p46
    %p48 = scmp.ne.s32.totalorder %s40, %s43
    %p49 = scmp.eq.s32.totalorder %s9, 0
    %p50 = por %p48, %p49
    %p51 = scmp.ne.s32.totalorder %s40, %s43
    %p52 = scmp.eq.s32.totalorder %s14, 1
    %p53 = por %p51, %p52
    %p54 = scmp.ne.s32.totalorder %s43, %s44
    %p55 = scmp.eq.s32.totalorder %s14, 0
    %p56 = por %p54, %p55
    %p57 = scmp.ne.s32.totalorder %s43, %s44
    %p58 = scmp.eq.s32.totalorder %s15, 1
    %p59 = por %p57, %p58
    %p61 = scmp.ne.s32.totalorder %s44, %s60
    %p62 = scmp.eq.s32.totalorder %s15, 0
    %p63 = por %p61, %p62
    %s65 = sadd.s32 %s64, 1
    %p68 = scmp.eq.s32.totalorder %s9, 1
    %p69 = scmp.ne.s32.totalorder %s64, %s66
    %p70 = scmp.eq.s32.totalorder %s9, 0
    %p71 = por %p69, %p70
    %p72 = scmp.ne.s32.totalorder %s64, %s66
    %p73 = scmp.eq.s32.totalorder %s14, 1
    %p74 = por %p72, %p73
    %p75 = scmp.ne.s32.totalorder %s66, %s67
    %p76 = scmp.eq.s32.totalorder %s14, 0
    %p77 = por %p75, %p76
    %p78 = scmp.ne.s32.totalorder %s66, %s67
    %p79 = scmp.eq.s32.totalorder %s15, 1
    %p80 = por %p78, %p79
    %p82 = scmp.ne.s32.totalorder %s67, %s81
    %p83 = scmp.eq.s32.totalorder %s15, 0
    %p84 = por %p82, %p83
    %s85 = ssub.s32 %s9, %s16
    %p86 = scmp.eq.s32.totalorder %s85, 0
    %s88 = sadd.s32 %s87, 1
    %s89 = scalar_select %p86, %s87, %s88
    %p92 = pneg %p86
    %p93 = scmp.eq.s32.totalorder %s9, 1
    %p94 = por %p92, %p93
    %p95 = scmp.ne.s32.totalorder %s87, %s90
    %p96 = scmp.eq.s32.totalorder %s9, 0
    %p97 = por %p95, %p96
    %p98 = scmp.ne.s32.totalorder %s87, %s90
    %p99 = scmp.eq.s32.totalorder %s14, 1
    %p100 = por %p98, %p99
    %p101 = scmp.ne.s32.totalorder %s90, %s91
    %p102 = scmp.eq.s32.totalorder %s14, 0
    %p103 = por %p101, %p102
    %p104 = scmp.ne.s32.totalorder %s90, %s91
    %p105 = scmp.eq.s32.totalorder %s15, 1
    %p106 = por %p104, %p105
    %p108 = scmp.ne.s32.totalorder %s91, %s107
    %p109 = scmp.eq.s32.totalorder %s15, 0
    %p110 = por %p108, %p109
    %p111 = scmp.le.s32.totalorder 1, %s9
    %p112 = scmp.lt.s32.totalorder %s9, 3
    %p113 = pnand %p111, %p112
    %p114 = pneg %p113
    // Predicated region
    $region9: #{discriminator_forward.7} parent=5 // pred_check
      _
    $region10: #{discriminator_forward.7} parent=5 // pred_check_branch
      %116 = sbr.rel (%p113) target = $region12
    $region11: #{discriminator_forward.7} parent=5 // pred_region
      %s117 = ssub.s32 %s9, 1
      // Predicated region
      $region13: #{discriminator_forward.7} parent=11 // pred_check
        %p118 = pneg %p30
      $region14: #{discriminator_forward.7} parent=11 // pred_check_branch
        %120 = sbr.rel (%p118) target = $region16
      $region15: #{discriminator_forward.7} parent=11 // pred_region
        _
      $region16: #{discriminator_forward.7} parent=11 // pred_fallthru
        _
      // Predicated region
      $region17: #{discriminator_forward.7} parent=11 // pred_check
        %p121 = pneg %p77
      $region18: #{discriminator_forward.7} parent=11 // pred_check_branch
        %123 = sbr.rel (%p121) target = $region20
      $region19: #{discriminator_forward.7} parent=11 // pred_region
        _
      $region20: #{discriminator_forward.7} parent=11 // pred_fallthru
        _
    $region12: #{discriminator_forward.7} parent=5 // pred_fallthru
      _
    %p124 = scmp.lt.s32.totalorder %s9, 2
    // Predicated region
    $region21: #{discriminator_forward.7} parent=5 // pred_check
      %p125 = pneg %p124
    $region22: #{discriminator_forward.7} parent=5 // pred_check_branch
      %127 = sbr.rel (%p125) target = $region24
    $region23: #{discriminator_forward.7} parent=5 // pred_region
      // Predicated region
      $region25: #{discriminator_forward.7} parent=23 // pred_check
        %p128 = pneg %p50
      $region26: #{discriminator_forward.7} parent=23 // pred_check_branch
        %130 = sbr.rel (%p128) target = $region28
      $region27: #{discriminator_forward.7} parent=23 // pred_region
        %p131 = scmp.lt.s32.totalorder %s9, 1
        %s132 = scalar_select %p131, %s9, 1
        %s133 = smul.addr %s132, 64
        %s134 = smul.addr %s133, 4
        %s135 = scalar_lea.vmem %s1, %s134
      $region28: #{discriminator_forward.7} parent=23 // pred_fallthru
        _
    $region24: #{discriminator_forward.7} parent=5 // pred_fallthru
      _
    %p136 = scmp.le.s32.totalorder 1, %s9
    %p137 = scmp.lt.s32.totalorder %s9, 3
    %p138 = pnand %p136, %p137
    %p139 = pneg %p138
    // Predicated region
    $region29: #{discriminator_forward.7} parent=5 // pred_check
      _
    $region30: #{discriminator_forward.7} parent=5 // pred_check_branch
      %141 = sbr.rel (%p138) target = $region32
    $region31: #{discriminator_forward.7} parent=5 // pred_region
      %s142 = ssub.s32 %s9, 1
      %p143 = pneg %p30
      %p144 = pneg %p27
      %p145 = scmp.lt.s32.totalorder %s14, 1
      %s146 = scalar_select %p145, %s14, 1
      %s147 = smul.addr %s146, 64
      %s148 = smul.addr %s147, 4
      %s149 = scalar_lea.vmem %s1, %s148
      %p150 = pneg %p56
      %p151 = pneg %p53
      %p152 = pneg %p77
      %p153 = pneg %p74
      %p154 = pneg %p103
      %p155 = pneg %p100
      %p156 = scmp.lt.s32.totalorder %s14, 1
      %s157 = scalar_select %p156, %s14, 1
      %s158 = smul.addr %s157, 8
      %s159 = scalar_lea.vmem %s3, %s158
      %p160 = scmp.lt.s32.totalorder %s14, 1
      %s161 = scalar_select %p160, %s14, 1
      %s162 = smul.addr %s161, 64
      %s163 = smul.addr %s162, 4
      %s164 = scalar_lea.vmem %s1, %s163
      %p165 = scmp.lt.s32.totalorder %s14, 1
      %s166 = scalar_select %p165, %s14, 1
      %s167 = smul.addr %s166, 8
      %s168 = scalar_lea.vmem %s3, %s167
      %v170 = vld [vmem:[%s0] sm:$0xff]
      %v171 = vld [vmem:[%s0 + $0x8] sm:$0xff]
      %v172 = vld [vmem:[%s164] sm:$0xf]
      %v173 = vld [vmem:[%s164 + $0x4] sm:$0xf]
      %v174 = vld [vmem:[%s164 + $0x8] sm:$0xf]
      %v175 = vld [vmem:[%s164 + $0xc] sm:$0xf]
      %v176 = vld [vmem:[%s164 + $0x10] sm:$0xf]
      %v177 = vld [vmem:[%s164 + $0x14] sm:$0xf]
      %v178 = vld [vmem:[%s164 + $0x18] sm:$0xf]
      %v179 = vld [vmem:[%s164 + $0x1c] sm:$0xf]
      %v180 = vld [vmem:[%s164 + $0x20] sm:$0xf]
      %v181 = vld [vmem:[%s164 + $0x24] sm:$0xf]
      %v182 = vld [vmem:[%s164 + $0x28] sm:$0xf]
      %v183 = vld [vmem:[%s164 + $0x2c] sm:$0xf]
      %v184 = vld [vmem:[%s164 + $0x30] sm:$0xf]
      %v185 = vld [vmem:[%s164 + $0x34] sm:$0xf]
      %v186 = vld [vmem:[%s164 + $0x38] sm:$0xf]
      %v187 = vld [vmem:[%s164 + $0x3c] sm:$0xf]
      %v188 = vld [vmem:[%s164 + $0x40] sm:$0xf]
      %v189 = vld [vmem:[%s164 + $0x44] sm:$0xf]
      %v190 = vld [vmem:[%s164 + $0x48] sm:$0xf]
      %v191 = vld [vmem:[%s164 + $0x4c] sm:$0xf]
      %v192 = vld [vmem:[%s164 + $0x50] sm:$0xf]
      %v193 = vld [vmem:[%s164 + $0x54] sm:$0xf]
      %v194 = vld [vmem:[%s164 + $0x58] sm:$0xf]
      %v195 = vld [vmem:[%s164 + $0x5c] sm:$0xf]
      %v196 = vld [vmem:[%s164 + $0x60] sm:$0xf]
      %v197 = vld [vmem:[%s164 + $0x64] sm:$0xf]
      %v198 = vld [vmem:[%s164 + $0x68] sm:$0xf]
      %v199 = vld [vmem:[%s164 + $0x6c] sm:$0xf]
      %v200 = vld [vmem:[%s164 + $0x70] sm:$0xf]
      %v201 = vld [vmem:[%s164 + $0x74] sm:$0xf]
      %v202 = vld [vmem:[%s164 + $0x78] sm:$0xf]
      %v203 = vld [vmem:[%s164 + $0x7c] sm:$0xf]
      %v204 = vld [vmem:[%s164 + $0x80] sm:$0xf]
      %v205 = vld [vmem:[%s164 + $0x84] sm:$0xf]
      %v206 = vld [vmem:[%s164 + $0x88] sm:$0xf]
      %v207 = vld [vmem:[%s164 + $0x8c] sm:$0xf]
      %v208 = vld [vmem:[%s164 + $0x90] sm:$0xf]
      %v209 = vld [vmem:[%s164 + $0x94] sm:$0xf]
      %v210 = vld [vmem:[%s164 + $0x98] sm:$0xf]
      %v211 = vld [vmem:[%s164 + $0x9c] sm:$0xf]
      %v212 = vld [vmem:[%s164 + $0xa0] sm:$0xf]
      %v213 = vld [vmem:[%s164 + $0xa4] sm:$0xf]
      %v214 = vld [vmem:[%s164 + $0xa8] sm:$0xf]
      %v215 = vld [vmem:[%s164 + $0xac] sm:$0xf]
      %v216 = vld [vmem:[%s164 + $0xb0] sm:$0xf]
      %v217 = vld [vmem:[%s164 + $0xb4] sm:$0xf]
      %v218 = vld [vmem:[%s164 + $0xb8] sm:$0xf]
      %v219 = vld [vmem:[%s164 + $0xbc] sm:$0xf]
      %v220 = vld [vmem:[%s164 + $0xc0] sm:$0xf]
      %v221 = vld [vmem:[%s164 + $0xc4] sm:$0xf]
      %v222 = vld [vmem:[%s164 + $0xc8] sm:$0xf]
      %v223 = vld [vmem:[%s164 + $0xcc] sm:$0xf]
      %v224 = vld [vmem:[%s164 + $0xd0] sm:$0xf]
      %v225 = vld [vmem:[%s164 + $0xd4] sm:$0xf]
      %v226 = vld [vmem:[%s164 + $0xd8] sm:$0xf]
      %v227 = vld [vmem:[%s164 + $0xdc] sm:$0xf]
      %v228 = vld [vmem:[%s164 + $0xe0] sm:$0xf]
      %v229 = vld [vmem:[%s164 + $0xe4] sm:$0xf]
      %v230 = vld [vmem:[%s164 + $0xe8] sm:$0xf]
      %v231 = vld [vmem:[%s164 + $0xec] sm:$0xf]
      %v232 = vld [vmem:[%s164 + $0xf0] sm:$0xf]
      %v233 = vld [vmem:[%s164 + $0xf4] sm:$0xf]
      %v234 = vld [vmem:[%s164 + $0xf8] sm:$0xf]
      %v235 = vld [vmem:[%s164 + $0xfc] sm:$0xf]
      %v236 = vld [vmem:[%s2] sm:$0xff]
      %v239 = vunpack.c.l.b16 %v170
      %v240 = vunpack.c.h.b16 %v170
      %v241 = vunpack.c.l.b16 %v171
      %v242 = vunpack.c.h.b16 %v171
      %v243 = vpack.c.b16 %v239, %v239
      %v244 = vpack.c.b16 %v240, %v240
      %v245 = vpack.c.b16 %v241, %v241
      %v246 = vpack.c.b16 %v242, %v242
      %v315 = vunpack.c.l.b16 %v172
      %v316 = vunpack.c.l.b16 %v173
      %v317 = vunpack.c.l.b16 %v174
      %v318 = vunpack.c.l.b16 %v175
      %v319 = vunpack.c.l.b16 %v176
      %v320 = vunpack.c.l.b16 %v177
      %v321 = vunpack.c.l.b16 %v178
      %v322 = vunpack.c.l.b16 %v179
      %v323 = vunpack.c.l.b16 %v180
      %v324 = vunpack.c.l.b16 %v181
      %v325 = vunpack.c.l.b16 %v182
      %v326 = vunpack.c.l.b16 %v183
      %v327 = vunpack.c.l.b16 %v184
      %v328 = vunpack.c.l.b16 %v185
      %v329 = vunpack.c.l.b16 %v186
      %v330 = vunpack.c.l.b16 %v187
      %v331 = vunpack.c.l.b16 %v188
      %v332 = vunpack.c.l.b16 %v189
      %v333 = vunpack.c.l.b16 %v190
      %v334 = vunpack.c.l.b16 %v191
      %v335 = vunpack.c.l.b16 %v192
      %v336 = vunpack.c.l.b16 %v193
      %v337 = vunpack.c.l.b16 %v194
      %v338 = vunpack.c.l.b16 %v195
      %v339 = vunpack.c.l.b16 %v196
      %v340 = vunpack.c.l.b16 %v197
      %v341 = vunpack.c.l.b16 %v198
      %v342 = vunpack.c.l.b16 %v199
      %v343 = vunpack.c.l.b16 %v200
      %v344 = vunpack.c.l.b16 %v201
      %v345 = vunpack.c.l.b16 %v202
      %v346 = vunpack.c.l.b16 %v203
      %v347 = vunpack.c.l.b16 %v204
      %v348 = vunpack.c.l.b16 %v205
      %v349 = vunpack.c.l.b16 %v206
      %v350 = vunpack.c.l.b16 %v207
      %v351 = vunpack.c.l.b16 %v208
      %v352 = vunpack.c.l.b16 %v209
      %v353 = vunpack.c.l.b16 %v210
      %v354 = vunpack.c.l.b16 %v211
      %v355 = vunpack.c.l.b16 %v212
      %v356 = vunpack.c.l.b16 %v213
      %v357 = vunpack.c.l.b16 %v214
      %v358 = vunpack.c.l.b16 %v215
      %v359 = vunpack.c.l.b16 %v216
      %v360 = vunpack.c.l.b16 %v217
      %v361 = vunpack.c.l.b16 %v218
      %v362 = vunpack.c.l.b16 %v219
      %v363 = vunpack.c.l.b16 %v220
      %v364 = vunpack.c.l.b16 %v221
      %v365 = vunpack.c.l.b16 %v222
      %v366 = vunpack.c.l.b16 %v223
      %v367 = vunpack.c.l.b16 %v224
      %v368 = vunpack.c.l.b16 %v225
      %v369 = vunpack.c.l.b16 %v226
      %v370 = vunpack.c.l.b16 %v227
      %v371 = vunpack.c.l.b16 %v228
      %v372 = vunpack.c.l.b16 %v229
      %v373 = vunpack.c.l.b16 %v230
      %v374 = vunpack.c.l.b16 %v231
      %v375 = vunpack.c.l.b16 %v232
      %v376 = vunpack.c.l.b16 %v233
      %v377 = vunpack.c.l.b16 %v234
      %v378 = vunpack.c.l.b16 %v235
      %v379 = vpack.c.b16 %v316, %v315
      %v380 = vpack.c.b16 %v318, %v317
      %v381 = vpack.c.b16 %v320, %v319
      %v382 = vpack.c.b16 %v322, %v321
      %v383 = vpack.c.b16 %v324, %v323
      %v384 = vpack.c.b16 %v326, %v325
      %v385 = vpack.c.b16 %v328, %v327
      %v386 = vpack.c.b16 %v330, %v329
      %v387 = vpack.c.b16 %v332, %v331
      %v388 = vpack.c.b16 %v334, %v333
      %v389 = vpack.c.b16 %v336, %v335
      %v390 = vpack.c.b16 %v338, %v337
      %v391 = vpack.c.b16 %v340, %v339
      %v392 = vpack.c.b16 %v342, %v341
      %v393 = vpack.c.b16 %v344, %v343
      %v394 = vpack.c.b16 %v346, %v345
      %v395 = vpack.c.b16 %v348, %v347
      %v396 = vpack.c.b16 %v350, %v349
      %v397 = vpack.c.b16 %v352, %v351
      %v398 = vpack.c.b16 %v354, %v353
      %v399 = vpack.c.b16 %v356, %v355
      %v400 = vpack.c.b16 %v358, %v357
      %v401 = vpack.c.b16 %v360, %v359
      %v402 = vpack.c.b16 %v362, %v361
      %v403 = vpack.c.b16 %v364, %v363
      %v404 = vpack.c.b16 %v366, %v365
      %v405 = vpack.c.b16 %v368, %v367
      %v406 = vpack.c.b16 %v370, %v369
      %v407 = vpack.c.b16 %v372, %v371
      %v408 = vpack.c.b16 %v374, %v373
      %v409 = vpack.c.b16 %v376, %v375
      %v410 = vpack.c.b16 %v378, %v377
      %443 = vmatprep.subr.bf16.mxu0 0
      %444 = vmatpush1.bf16.msra.mxu0 %v386
      %445 = vmatprep.subr.bf16.mxu0 0
      %446 = vmatpush1.bf16.msra.mxu0 %v385
      %447 = vmatprep.subr.bf16.mxu0 0
      %448 = vmatpush1.bf16.msra.mxu0 %v384
      %449 = vmatprep.subr.bf16.mxu0 0
      %450 = vmatpush1.bf16.msra.mxu0 %v383
      %451 = vmatprep.subr.bf16.mxu0 0
      %452 = vmatpush1.bf16.msra.mxu0 %v382
      %453 = vmatprep.subr.bf16.mxu0 0
      %454 = vmatpush1.bf16.msra.mxu0 %v381
      %455 = vmatprep.subr.bf16.mxu0 0
      %456 = vmatpush1.bf16.msra.mxu0 %v380
      %457 = vmatprep.subr.bf16.mxu0 0
      %458 = vmatpush1.bf16.msra.mxu0 %v379
      %459 = vmatprep.subr.bf16.mxu0 0
      %460 = vmatpush2.bf16.msra.mxu0 %v394
      %461 = vmatprep.subr.bf16.mxu0 0
      %462 = vmatpush2.bf16.msra.mxu0 %v393
      %463 = vmatprep.subr.bf16.mxu0 0
      %464 = vmatpush2.bf16.msra.mxu0 %v392
      %465 = vmatprep.subr.bf16.mxu0 0
      %466 = vmatpush2.bf16.msra.mxu0 %v391
      %467 = vmatprep.subr.bf16.mxu0 0
      %468 = vmatpush2.bf16.msra.mxu0 %v390
      %469 = vmatprep.subr.bf16.mxu0 0
      %470 = vmatpush2.bf16.msra.mxu0 %v389
      %471 = vmatprep.subr.bf16.mxu0 0
      %472 = vmatpush2.bf16.msra.mxu0 %v388
      %473 = vmatprep.subr.bf16.mxu0 0
      %474 = vmatpush2.bf16.msra.mxu0 %v387
      %475 = vmatprep.mubr.bf16.mxu0 %v244
      %476 = vmatmul.mubr.bf16.gmra.mxu0 %v243
      %v477 = vpop.f32.mrf.mxu0
      %v478 = vadd.f32 %v236, %v477
      %v479 = vpop.f32.mrf.mxu0
      %v480 = vpop.f32.mrf.mxu0
      %v481 = vpop.f32.mrf.mxu0
      %482 = vdwg.mxu0
      %483 = vmatprep.subr.bf16.mxu0 0
      %484 = vmatpush1.bf16.msra.mxu0 %v402
      %485 = vmatprep.subr.bf16.mxu0 0
      %486 = vmatpush1.bf16.msra.mxu0 %v401
      %487 = vmatprep.subr.bf16.mxu0 0
      %488 = vmatpush1.bf16.msra.mxu0 %v400
      %489 = vmatprep.subr.bf16.mxu0 0
      %490 = vmatpush1.bf16.msra.mxu0 %v399
      %491 = vmatprep.subr.bf16.mxu0 0
      %492 = vmatpush1.bf16.msra.mxu0 %v398
      %493 = vmatprep.subr.bf16.mxu0 0
      %494 = vmatpush1.bf16.msra.mxu0 %v397
      %495 = vmatprep.subr.bf16.mxu0 0
      %496 = vmatpush1.bf16.msra.mxu0 %v396
      %497 = vmatprep.subr.bf16.mxu0 0
      %498 = vmatpush1.bf16.msra.mxu0 %v395
      %499 = vmatprep.subr.bf16.mxu0 0
      %500 = vmatpush2.bf16.msra.mxu0 %v410
      %501 = vmatprep.subr.bf16.mxu0 0
      %502 = vmatpush2.bf16.msra.mxu0 %v409
      %503 = vmatprep.subr.bf16.mxu0 0
      %504 = vmatpush2.bf16.msra.mxu0 %v408
      %505 = vmatprep.subr.bf16.mxu0 0
      %506 = vmatpush2.bf16.msra.mxu0 %v407
      %507 = vmatprep.subr.bf16.mxu0 0
      %508 = vmatpush2.bf16.msra.mxu0 %v406
      %509 = vmatprep.subr.bf16.mxu0 0
      %510 = vmatpush2.bf16.msra.mxu0 %v405
      %511 = vmatprep.subr.bf16.mxu0 0
      %512 = vmatpush2.bf16.msra.mxu0 %v404
      %513 = vmatprep.subr.bf16.mxu0 0
      %514 = vmatpush2.bf16.msra.mxu0 %v403
      %515 = vmatprep.mubr.bf16.mxu0 %v246
      %516 = vmatmul.mubr.bf16.gmra.mxu0 %v245
      %v517 = vpop.f32.mrf.mxu0
      %v518 = vadd.f32 %v478, %v517
      %v519 = vpop.f32.mrf.mxu0
      %v520 = vpop.f32.mrf.mxu0
      %v521 = vpop.f32.mrf.mxu0
      %522 = vdwg.mxu0
      %vm523 = vcmask 7168
      %524 = vst.msk [vmem:[%s168] sm:$0xff] %vm523, %v518
      %p525 = scmp.lt.s32.totalorder %s14, 1
      %s526 = scalar_select %p525, %s14, 1
      %s527 = smul.addr %s526, 8
      %s528 = scalar_lea.vmem %s3, %s527
      // Predicated region
      $region33: #{discriminator_forward.7} parent=31 // pred_check
        %p529 = pneg %p100
      $region34: #{discriminator_forward.7} parent=31 // pred_check_branch
        %531 = sbr.rel (%p529) target = $region36
      $region35: #{discriminator_forward.7} parent=31 // pred_region
        _
      $region36: #{discriminator_forward.7} parent=31 // pred_fallthru
        _
    $region32: #{discriminator_forward.7} parent=5 // pred_fallthru
      _
    %p532 = scmp.le.s32.totalorder 2, %s9
    // Predicated region
    $region37: #{discriminator_forward.7} parent=5 // pred_check
      %p533 = pneg %p532
    $region38: #{discriminator_forward.7} parent=5 // pred_check_branch
      %535 = sbr.rel (%p533) target = $region40
    $region39: #{discriminator_forward.7} parent=5 // pred_region
      %s536 = ssub.s32 %s9, 2
      // Predicated region
      $region41: #{discriminator_forward.7} parent=39 // pred_check
        %p537 = pneg %p106
      $region42: #{discriminator_forward.7} parent=39 // pred_check_branch
        %539 = sbr.rel (%p537) target = $region44
      $region43: #{discriminator_forward.7} parent=39 // pred_region
        %p540 = scmp.lt.s32.totalorder %s15, 1
        %s541 = scalar_select %p540, %s15, 1
        %s542 = smul.addr %s541, 8
        %s543 = scalar_lea.vmem %s3, %s542
      $region44: #{discriminator_forward.7} parent=39 // pred_fallthru
        _
    $region40: #{discriminator_forward.7} parent=5 // pred_fallthru
      _
  $region6: #{discriminator_forward.7} parent=0 // loop_footer
    %s13 = sadd.s32 1, %s9
  $region7: #{discriminator_forward.7} parent=0 // loop_footer_branch
    %8 = sbr.rel target = $region3
  $region8: #{discriminator_forward.7} parent=0 // loop_exit
    _

</llo_original>
